<compile_context>
chip_gen: v6e
topology: v6e:2x2x1
jax: 0.10.0
libtpu: 0.0.40
codegen_flags: <defaults>
</compile_context>

<pallas_src>
import functools
import math

import jax
import jax.numpy as jnp
import numpy as np
from jax.experimental import pallas as pl
from jax.experimental.pallas import tpu as pltpu


_VMEM_LIMIT = 48 * 1024 * 1024  # safe on v5e/v6e (128 MiB) and v7x (64 MiB) alike


def _compiler_params(sem):
    return pltpu.CompilerParams(dimension_semantics=sem, vmem_limit_bytes=_VMEM_LIMIT)


def _pick_tile(dim, candidates):
    """Largest candidate tile that evenly divides `dim`; fall back to the full dim."""
    for c in candidates:
        if c <= dim and dim % c == 0:
            return c
    return dim


# ----------------------------- fused linear kernel -----------------------------

def _linear_kernel(*refs, has_bias, fuse_ln, add_residual, act, eps):
    # refs = (x, w, [b], [ln_w, ln_b], [residual], out)
    x_ref, w_ref = refs[0], refs[1]
    idx = 2
    if has_bias:
        b_ref = refs[idx]
        idx += 1
    if fuse_ln:
        ln_w_ref, ln_b_ref = refs[idx], refs[idx + 1]
        idx += 2
    if add_residual:
        res_ref = refs[idx]
        idx += 1
    o_ref = refs[idx]

    x = x_ref[...]
    if fuse_ln:
        # fp32 LayerNorm prologue (matches the fp16-safe LayerNorm subclass).
        xf = x.astype(jnp.float32)
        mu = jnp.mean(xf, axis=-1, keepdims=True)
        var = jnp.mean(jnp.square(xf - mu), axis=-1, keepdims=True)
        x = (xf - mu) * jax.lax.rsqrt(var + eps) * ln_w_ref[...] + ln_b_ref[...]

    # bf16 operands on the MXU, fp32 accumulation.
    y = jnp.dot(x.astype(w_ref.dtype), w_ref[...], preferred_element_type=jnp.float32)
    if has_bias:
        y = y + b_ref[...]

    if act == "quickgelu":
        y = y * jax.nn.sigmoid(1.702 * y)        # QuickGELU: x * sigmoid(1.702 x)
    if add_residual:
        y = y + res_ref[...].astype(jnp.float32)
    o_ref[...] = y.astype(o_ref.dtype)


def linear(x, w, b=None, *, ln=None, residual=None, act="none", eps=1e-5):
    """y = [residual +] act( LN?(x) @ w [+ b] ).

    x: [M, K] fp32, w: [K, N] (bf16), b: [N] fp32 or None.
    Tiled over M and N (both "parallel" for megacore); K kept as one block so the
    LayerNorm prologue sees whole rows.
    """
    M, K = x.shape
    N = w.shape[1]
    tm = _pick_tile(M, (256, 128, 64, 32, 16, 8))
    tn = _pick_tile(N, (512, 256, 128))

    in_specs = [pl.BlockSpec((tm, K), lambda i, j: (i, 0)),
                pl.BlockSpec((K, tn), lambda i, j: (0, j))]
    args = [x, w]
    if b is not None:
        in_specs += [pl.BlockSpec((1, tn), lambda i, j: (0, j))]
        args += [b.reshape(1, N).astype(jnp.float32)]
    if ln is not None:
        ln_w, ln_b = ln
        in_specs += [pl.BlockSpec((1, K), lambda i, j: (0, 0)),
                     pl.BlockSpec((1, K), lambda i, j: (0, 0))]
        args += [ln_w.reshape(1, K).astype(jnp.float32),
                 ln_b.reshape(1, K).astype(jnp.float32)]
    if residual is not None:
        in_specs += [pl.BlockSpec((tm, tn), lambda i, j: (i, j))]
        args += [residual]

    kernel = functools.partial(_linear_kernel, has_bias=b is not None,
                               fuse_ln=ln is not None,
                               add_residual=residual is not None, act=act, eps=eps)
    return pl.pallas_call(
        kernel,
        out_shape=jax.ShapeDtypeStruct((M, N), jnp.float32),
        grid=(M // tm, N // tn),
        in_specs=in_specs,
        out_specs=pl.BlockSpec((tm, tn), lambda i, j: (i, j)),
        compiler_params=_compiler_params(("parallel", "parallel")),
    )(*args)


# ----------------------------- LayerNorm kernel (ln_pre / ln_post) -----------------------------

def _ln_kernel(x_ref, w_ref, b_ref, o_ref, *, eps):
    x = x_ref[...].astype(jnp.float32)
    mu = jnp.mean(x, axis=-1, keepdims=True)
    var = jnp.mean(jnp.square(x - mu), axis=-1, keepdims=True)
    xn = (x - mu) * jax.lax.rsqrt(var + eps)
    o_ref[...] = (xn * w_ref[...] + b_ref[...]).astype(o_ref.dtype)


def layer_norm(x, w, b, eps=1e-5):
    M, D = x.shape
    tm = _pick_tile(M, (512, 256, 128, 64, 32, 16, 8))
    return pl.pallas_call(
        functools.partial(_ln_kernel, eps=eps),
        out_shape=jax.ShapeDtypeStruct((M, D), x.dtype),
        grid=(M // tm,),
        in_specs=[pl.BlockSpec((tm, D), lambda i: (i, 0)),
                  pl.BlockSpec((1, D), lambda i: (0, 0)),
                  pl.BlockSpec((1, D), lambda i: (0, 0))],
        out_specs=pl.BlockSpec((tm, D), lambda i: (i, 0)),
        compiler_params=_compiler_params(("parallel",)),
    )(x, w.reshape(1, D), b.reshape(1, D))


# ----------------------------- attention kernel -----------------------------

def _attn_kernel(qkv_ref, o_ref, *, num_heads, compute_dtype):
    # qkv_ref: (1, L, 3D) fp32, Q already pre-scaled by 1/sqrt(dh) via weight folding.
    qkv = qkv_ref[0]
    L, threeD = qkv.shape
    D = threeD // 3
    dh = D // num_heads
    outs = []
    for h in range(num_heads):                    # static loop; one lane-dense store below
        q = qkv[:, h * dh:(h + 1) * dh].astype(compute_dtype)
        k = qkv[:, D + h * dh:D + (h + 1) * dh].astype(compute_dtype)
        v = qkv[:, 2 * D + h * dh:2 * D + (h + 1) * dh].astype(compute_dtype)
        s = jax.lax.dot_general(q, k, (((1,), (1,)), ((), ())),
                                preferred_element_type=jnp.float32)   # q @ k.T, no transpose
        m = jnp.max(s, axis=-1, keepdims=True)
        p = jnp.exp(s - m)
        p = p * pl.reciprocal(jnp.sum(p, axis=-1, keepdims=True), approx=True)
        outs.append(jnp.dot(p.astype(compute_dtype), v,
                            preferred_element_type=jnp.float32))
    o_ref[0] = jnp.concatenate(outs, axis=-1).astype(o_ref.dtype)     # lane-dense [L, D]


def attention(qkv, num_heads, compute_dtype=jnp.bfloat16):
    """qkv: [B, L, 3D] -> [B, L, D]; all heads handled inside the kernel."""
    B, L, threeD = qkv.shape
    D = threeD // 3
    return pl.pallas_call(
        functools.partial(_attn_kernel, num_heads=num_heads, compute_dtype=compute_dtype),
        out_shape=jax.ShapeDtypeStruct((B, L, D), jnp.float32),
        grid=(B,),
        in_specs=[pl.BlockSpec((1, L, threeD), lambda b: (b, 0, 0))],
        out_specs=pl.BlockSpec((1, L, D), lambda b: (b, 0, 0)),
        compiler_params=_compiler_params(("parallel",)),
    )(qkv)


# ----------------------------- params -----------------------------

def init_params(key, cfg):
    """Weights stored in matmul layout [in, out] (pre-transposed once, not per forward)."""
    d = cfg["vision_width"]
    P = cfg["patch_size"]
    layers = cfg["vision_layers"]
    out_dim = cfg["output_dim"]
    res = cfg["input_resolution"]
    scale = d ** -0.5
    keys = jax.random.split(key, 8 + layers)
    params = {
        "conv_w_mat": jax.random.normal(keys[0], (3 * P * P, d), jnp.float32) * 0.02,
        "class_embedding": scale * jax.random.normal(keys[1], (d,), jnp.float32),
        "positional_embedding": scale * jax.random.normal(
            keys[2], ((res // P) ** 2 + 1, d), jnp.float32),
        "ln_pre_w": jnp.ones((d,), jnp.float32), "ln_pre_b": jnp.zeros((d,), jnp.float32),
        "ln_post_w": jnp.ones((d,), jnp.float32), "ln_post_b": jnp.zeros((d,), jnp.float32),
        "proj": scale * jax.random.normal(keys[3], (d, out_dim), jnp.float32),
        "blocks": [],
    }
    for i in range(layers):
        bk = jax.random.split(keys[8 + i], 4)
        params["blocks"].append({
            "in_proj_w": jax.random.normal(bk[0], (d, 3 * d), jnp.float32) * 0.02,
            "in_proj_b": jnp.zeros((3 * d,), jnp.float32),
            "out_proj_w": jax.random.normal(bk[1], (d, d), jnp.float32) * 0.02,
            "out_proj_b": jnp.zeros((d,), jnp.float32),
            "ln1_w": jnp.ones((d,), jnp.float32), "ln1_b": jnp.zeros((d,), jnp.float32),
            "ln2_w": jnp.ones((d,), jnp.float32), "ln2_b": jnp.zeros((d,), jnp.float32),
            "fc_w": jax.random.normal(bk[2], (d, 4 * d), jnp.float32) * 0.02,
            "fc_b": jnp.zeros((4 * d,), jnp.float32),
            "cproj_w": jax.random.normal(bk[3], (4 * d, d), jnp.float32) * 0.02,
            "cproj_b": jnp.zeros((d,), jnp.float32),
        })
    return params


def prepare_params(params, cfg, compute_dtype=jnp.bfloat16):
    """One-time prep: cast matmul weights to bf16 and fold 1/sqrt(dh) into the Q projection."""
    D = cfg["vision_width"]
    dh = D // cfg["vision_heads"]
    qscale = 1.0 / math.sqrt(dh)
    cp = {k: v for k, v in params.items() if k != "blocks"}
    cp["conv_w_mat"] = params["conv_w_mat"].astype(compute_dtype)
    cp["proj"] = params["proj"].astype(compute_dtype)
    cp["blocks"] = []
    for blk in params["blocks"]:
        b = dict(blk)
        b["in_proj_w"] = blk["in_proj_w"].at[:, :D].multiply(qscale).astype(compute_dtype)
        b["in_proj_b"] = blk["in_proj_b"].at[:D].multiply(qscale)
        b["out_proj_w"] = blk["out_proj_w"].astype(compute_dtype)
        b["fc_w"] = blk["fc_w"].astype(compute_dtype)
        b["cproj_w"] = blk["cproj_w"].astype(compute_dtype)
        cp["blocks"].append(b)
    return cp


# ----------------------------- forward -----------------------------

def residual_block(x, p, num_heads):
    B, L, D = x.shape
    M = B * L
    x2 = x.reshape(M, D)

    # --- attention branch: x + out_proj(attn(ln_1(x))) ---
    qkv = linear(x2, p["in_proj_w"], p["in_proj_b"],
                 ln=(p["ln1_w"], p["ln1_b"]))                       # fused LN -> QKV
    o = attention(qkv.reshape(B, L, 3 * D), num_heads)              # heads inside kernel
    x2 = linear(o.reshape(M, D), p["out_proj_w"], p["out_proj_b"],
                residual=x2)                                        # fused residual add

    # --- MLP branch: x + c_proj(quickgelu(c_fc(ln_2(x))))  (DropPath == Identity) ---
    h = linear(x2, p["fc_w"], p["fc_b"],
               ln=(p["ln2_w"], p["ln2_b"]), act="quickgelu")        # fused LN -> fc -> gelu
    x2 = linear(h, p["cproj_w"], p["cproj_b"], residual=x2)         # fused residual add
    return x2.reshape(B, L, D)


def visual_encoder_forward(x, cparams, cfg):
    B, C, H, W = x.shape
    P = cfg["patch_size"]
    D = cfg["vision_width"]
    Hp, Wp = H // P, W // P
    Np = Hp * Wp

    # conv1 (stride == kernel) as patch extraction (XLA reshape/transpose) + Pallas matmul
    patches = x.reshape(B, C, Hp, P, Wp, P).transpose(0, 2, 4, 1, 3, 5).reshape(B * Np, C * P * P)
    xp = linear(patches, cparams["conv_w_mat"]).reshape(B, Np, D)   # conv1 has no bias

    # class token + positional embedding (tiny, left to XLA)
    cls = jnp.broadcast_to(cparams["class_embedding"][None, None, :], (B, 1, D))
    xt = jnp.concatenate([cls, xp], axis=1) + cparams["positional_embedding"][None]
    L = xt.shape[1]

    # ln_pre
    xt = layer_norm(xt.reshape(B * L, D), cparams["ln_pre_w"], cparams["ln_pre_b"]).reshape(B, L, D)

    # transformer (the (L,N,E) permutes are no-ops in [B,L,D] layout)
    for p in cparams["blocks"]:
        xt = residual_block(xt, p, cfg["vision_heads"])

    # ln_post
    xt = layer_norm(xt.reshape(B * L, D), cparams["ln_post_w"], cparams["ln_post_b"]).reshape(B, L, D)

    # img_embs = x[:, 0, :] @ proj
    img_embs = linear(xt[:, 0, :], cparams["proj"])
    return img_embs, xt[:, 1:, :]


# ----------------------------- pure-JAX fp32 reference -----------------------------

def _ref_ln(x, w, b, eps=1e-5):
    xf = x.astype(jnp.float32)
    mu = jnp.mean(xf, axis=-1, keepdims=True)
    var = jnp.mean(jnp.square(xf - mu), axis=-1, keepdims=True)
    return ((xf - mu) / jnp.sqrt(var + eps)) * w + b


def ref_forward(x, params, cfg):
    B, C, H, W = x.shape
    P, D, nh = cfg["patch_size"], cfg["vision_width"], cfg["vision_heads"]
    Hp, Wp = H // P, W // P
    patches = x.reshape(B, C, Hp, P, Wp, P).transpose(0, 2, 4, 1, 3, 5).reshape(B, Hp * Wp, C * P * P)
    xs = patches @ params["conv_w_mat"]
    cls = jnp.broadcast_to(params["class_embedding"][None, None, :], (B, 1, D))
    xs = jnp.concatenate([cls, xs], axis=1) + params["positional_embedding"][None]
    L = xs.shape[1]
    xs = _ref_ln(xs, params["ln_pre_w"], params["ln_pre_b"])
    dh = D // nh
    for p in params["blocks"]:
        h = _ref_ln(xs, p["ln1_w"], p["ln1_b"])
        qkv = h @ p["in_proj_w"] + p["in_proj_b"]
        q, k, v = jnp.split(qkv, 3, axis=-1)
        q = q.reshape(B, L, nh, dh).transpose(0, 2, 1, 3)
        k = k.reshape(B, L, nh, dh).transpose(0, 2, 1, 3)
        v = v.reshape(B, L, nh, dh).transpose(0, 2, 1, 3)
        s = jnp.einsum("bhqd,bhkd->bhqk", q, k) / math.sqrt(dh)
        a = jax.nn.softmax(s, axis=-1)
        o = jnp.einsum("bhqk,bhkd->bhqd", a, v).transpose(0, 2, 1, 3).reshape(B, L, D)
        xs = xs + (o @ p["out_proj_w"] + p["out_proj_b"])
        h = _ref_ln(xs, p["ln2_w"], p["ln2_b"])
        h = h @ p["fc_w"] + p["fc_b"]
        h = h * jax.nn.sigmoid(1.702 * h)
        xs = xs + (h @ p["cproj_w"] + p["cproj_b"])
    xs = _ref_ln(xs, params["ln_post_w"], params["ln_post_b"])
    return xs[:, 0, :] @ params["proj"], xs[:, 1:, :]


# ----------------------------- main -----------------------------

if __name__ == "__main__":
    cfg = dict(input_resolution=16, patch_size=4, vision_width=32,
               vision_layers=2, vision_heads=4, output_dim=16, n_frames=1)

    key = jax.random.PRNGKey(0)
    pkey, xkey = jax.random.split(key)
    params = init_params(pkey, cfg)
    cparams = prepare_params(params, cfg)            # bf16 weights, folded q-scale (one-time)
    x = jax.random.normal(xkey, (2, 3, cfg["input_resolution"], cfg["input_resolution"]),
                          jnp.float32)

    fwd = jax.jit(functools.partial(visual_encoder_forward, cfg=cfg))
    img_embs, tokens = fwd(x, cparams)
    img_embs = jax.block_until_ready(img_embs)
    tokens = jax.block_until_ready(tokens)

    ref_img, ref_tok = ref_forward(x, params, cfg)
    # bf16 MXU operands + approx reciprocal -> relaxed tolerances vs the fp32 reference.
    np.testing.assert_allclose(np.asarray(img_embs), np.asarray(ref_img), rtol=5e-2, atol=5e-2)
    np.testing.assert_allclose(np.asarray(tokens), np.asarray(ref_tok), rtol=5e-2, atol=5e-2)

    print("KERNEL_OK")
</pallas_src>

<mosaic_0001>
module attributes {stable_mosaic.version = 11 : i64} {
  func.func @_linear_kernel(%arg0: i32, %arg1: i32, %arg2: memref<32x48xf32, #tpu.memory_space<vmem>>, %arg3: memref<48x32xbf16, #tpu.memory_space<vmem>>, %arg4: memref<32x32xf32, #tpu.memory_space<vmem>>) attributes {dimension_semantics = [#tpu.dimension_semantics<parallel>, #tpu.dimension_semantics<parallel>], iteration_bounds = array<i64: 1, 1>, scalar_prefetch = 0 : i64, scratch_operands = 0 : i64, tpu.core_type = #tpu.core_type<tc>, window_params = [{transform_indices = @transform_0, window_bounds = array<i64: 32, 48>}, {transform_indices = @transform_1, window_bounds = array<i64: 48, 32>}, {transform_indices = @transform_2, window_bounds = array<i64: 32, 32>}]} {
    %c0 = arith.constant 0 : index
    %c0_0 = arith.constant 0 : index
    %0 = vector.load %arg2[%c0, %c0_0] : memref<32x48xf32, #tpu.memory_space<vmem>>, vector<32x48xf32>
    %1 = arith.truncf %0 : vector<32x48xf32> to vector<32x48xbf16>
    %c0_1 = arith.constant 0 : index
    %c0_2 = arith.constant 0 : index
    %2 = vector.load %arg3[%c0_1, %c0_2] : memref<48x32xbf16, #tpu.memory_space<vmem>>, vector<48x32xbf16>
    %cst = arith.constant dense<0.000000e+00> : vector<32x32xf32>
    %3 = tpu.matmul %1, %2, %cst {dimension_numbers = #tpu.dot_dimension_numbers<[1], [0], [0], [1], [0, 0, 1, 1], [], []>} : vector<32x48xbf16>, vector<48x32xbf16>, vector<32x32xf32> -> vector<32x32xf32>
    %c0_3 = arith.constant 0 : index
    %c0_4 = arith.constant 0 : index
    %4 = vector.load %arg4[%c0_3, %c0_4] : memref<32x32xf32, #tpu.memory_space<vmem>>, vector<32x32xf32>
    tpu.vector_store %arg4[%c0_3, %c0_4], %3 {strides = array<i32>} : memref<32x32xf32, #tpu.memory_space<vmem>>, vector<32x32xf32>,
    return
  }
  func.func @transform_0(%arg0: i32, %arg1: i32) -> (i32, i32) {
    %c0_i32 = arith.constant 0 : i32
    %c0_i32_0 = arith.constant 0 : i32
    return %arg0, %c0_i32 : i32, i32
  }
  func.func @transform_1(%arg0: i32, %arg1: i32) -> (i32, i32) {
    %c0_i32 = arith.constant 0 : i32
    %c0_i32_0 = arith.constant 0 : i32
    return %c0_i32, %arg1 : i32, i32
  }
  func.func @transform_2(%arg0: i32, %arg1: i32) -> (i32, i32) {
    %c0_i32 = arith.constant 0 : i32
    return %arg0, %arg1 : i32, i32
  }
}

module attributes {stable_mosaic.version = 11 : i64} {
  func.func @_ln_kernel(%arg0: i32, %arg1: memref<34x32xf32, #tpu.memory_space<vmem>>, %arg2: memref<1x32xf32, #tpu.memory_space<vmem>>, %arg3: memref<1x32xf32, #tpu.memory_space<vmem>>, %arg4: memref<34x32xf32, #tpu.memory_space<vmem>>) attributes {dimension_semantics = [#tpu.dimension_semantics<parallel>], iteration_bounds = array<i64: 1>, scalar_prefetch = 0 : i64, scratch_operands = 0 : i64, tpu.core_type = #tpu.core_type<tc>, window_params = [{transform_indices = @transform_0, window_bounds = array<i64: 34, 32>}, {pipeline_mode = #tpu.pipeline_mode<synchronous>, transform_indices = @transform_1, window_bounds = array<i64: 1, 32>}, {pipeline_mode = #tpu.pipeline_mode<synchronous>, transform_indices = @transform_2, window_bounds = array<i64: 1, 32>}, {transform_indices = @transform_3, window_bounds = array<i64: 34, 32>}]} {
    %c0 = arith.constant 0 : index
    %c0_0 = arith.constant 0 : index
    %0 = vector.load %arg1[%c0, %c0_0] : memref<34x32xf32, #tpu.memory_space<vmem>>, vector<34x32xf32>
    %cst = arith.constant dense<0.000000e+00> : vector<34xf32>
    %1 = vector.multi_reduction <add>, %0, %cst [1] : vector<34x32xf32> to vector<34xf32>
    %2 = vector.shape_cast %1 : vector<34xf32> to vector<34x1xf32>
    %cst_1 = arith.constant 3.200000e+01 : f32
    %3 = vector.broadcast %cst_1 : f32 to vector<34x1xf32>
    %4 = arith.divf %2, %3 : vector<34x1xf32>
    %5 = vector.broadcast %4 : vector<34x1xf32> to vector<34x32xf32>
    %6 = arith.subf %0, %5 : vector<34x32xf32>
    %7 = arith.mulf %6, %6 : vector<34x32xf32>
    %cst_2 = arith.constant dense<0.000000e+00> : vector<34xf32>
    %8 = vector.multi_reduction <add>, %7, %cst_2 [1] : vector<34x32xf32> to vector<34xf32>
    %9 = vector.shape_cast %8 : vector<34xf32> to vector<34x1xf32>
    %cst_3 = arith.constant 3.200000e+01 : f32
    %10 = vector.broadcast %cst_3 : f32 to vector<34x1xf32>
    %11 = arith.divf %9, %10 : vector<34x1xf32>
    %12 = vector.broadcast %4 : vector<34x1xf32> to vector<34x32xf32>
    %13 = arith.subf %0, %12 : vector<34x32xf32>
    %cst_4 = arith.constant 9.99999974E-6 : f32
    %14 = vector.broadcast %cst_4 : f32 to vector<34x1xf32>
    %15 = arith.addf %11, %14 : vector<34x1xf32>
    %16 = math.rsqrt %15 : vector<34x1xf32>
    %17 = vector.broadcast %16 : vector<34x1xf32> to vector<34x32xf32>
    %18 = arith.mulf %13, %17 : vector<34x32xf32>
    %c0_5 = arith.constant 0 : index
    %c0_6 = arith.constant 0 : index
    %19 = vector.load %arg2[%c0_5, %c0_6] : memref<1x32xf32, #tpu.memory_space<vmem>>, vector<1x32xf32>
    %20 = vector.broadcast %19 : vector<1x32xf32> to vector<34x32xf32>
    %21 = arith.mulf %18, %20 : vector<34x32xf32>
    %c0_7 = arith.constant 0 : index
    %c0_8 = arith.constant 0 : index
    %22 = vector.load %arg3[%c0_7, %c0_8] : memref<1x32xf32, #tpu.memory_space<vmem>>, vector<1x32xf32>
    %23 = vector.broadcast %22 : vector<1x32xf32> to vector<34x32xf32>
    %24 = arith.addf %21, %23 : vector<34x32xf32>
    %c0_9 = arith.constant 0 : index
    %c0_10 = arith.constant 0 : index
    %25 = vector.load %arg4[%c0_9, %c0_10] : memref<34x32xf32, #tpu.memory_space<vmem>>, vector<34x32xf32>
    tpu.vector_store %arg4[%c0_9, %c0_10], %24 {strides = array<i32>} : memref<34x32xf32, #tpu.memory_space<vmem>>, vector<34x32xf32>,
    return
  }
  func.func @transform_0(%arg0: i32) -> (i32, i32) {
    %c0_i32 = arith.constant 0 : i32
    %c0_i32_0 = arith.constant 0 : i32
    return %arg0, %c0_i32 : i32, i32
  }
  func.func @transform_1(%arg0: i32) -> (i32, i32) {
    %c0_i32 = arith.constant 0 : i32
    %c0_i32_0 = arith.constant 0 : i32
    %c0_i32_1 = arith.constant 0 : i32
    return %c0_i32, %c0_i32_0 : i32, i32
  }
  func.func @transform_2(%arg0: i32) -> (i32, i32) {
    %c0_i32 = arith.constant 0 : i32
    %c0_i32_0 = arith.constant 0 : i32
    %c0_i32_1 = arith.constant 0 : i32
    return %c0_i32, %c0_i32_0 : i32, i32
  }
  func.func @transform_3(%arg0: i32) -> (i32, i32) {
    %c0_i32 = arith.constant 0 : i32
    %c0_i32_0 = arith.constant 0 : i32
    return %arg0, %c0_i32 : i32, i32
  }
}

module attributes {stable_mosaic.version = 11 : i64} {
  func.func @_attn_kernel(%arg0: i32, %arg1: memref<1x17x96xf32, #tpu.memory_space<vmem>>, %arg2: memref<1x17x32xf32, #tpu.memory_space<vmem>>) attributes {dimension_semantics = [#tpu.dimension_semantics<parallel>], iteration_bounds = array<i64: 2>, scalar_prefetch = 0 : i64, scratch_operands = 0 : i64, tpu.core_type = #tpu.core_type<tc>, window_params = [{transform_indices = @transform_0, window_bounds = array<i64: 1, 17, 96>}, {transform_indices = @transform_1, window_bounds = array<i64: 1, 17, 32>}]} {
    %c0 = arith.constant 0 : index
    %c0_0 = arith.constant 0 : index
    %c0_1 = arith.constant 0 : index
    %0 = vector.load %arg1[%c0, %c0_0, %c0_1] : memref<1x17x96xf32, #tpu.memory_space<vmem>>, vector<1x17x96xf32>
    %1 = vector.shape_cast %0 : vector<1x17x96xf32> to vector<17x96xf32>
    %2 = vector.extract_strided_slice %1 {offsets = [0, 0], sizes = [17, 8], strides = [1, 1]} : vector<17x96xf32> to vector<17x8xf32>
    %3 = arith.truncf %2 : vector<17x8xf32> to vector<17x8xbf16>
    %4 = vector.extract_strided_slice %1 {offsets = [0, 32], sizes = [17, 8], strides = [1, 1]} : vector<17x96xf32> to vector<17x8xf32>
    %5 = arith.truncf %4 : vector<17x8xf32> to vector<17x8xbf16>
    %6 = vector.extract_strided_slice %1 {offsets = [0, 64], sizes = [17, 8], strides = [1, 1]} : vector<17x96xf32> to vector<17x8xf32>
    %7 = arith.truncf %6 : vector<17x8xf32> to vector<17x8xbf16>
    %cst = arith.constant dense<0.000000e+00> : vector<17x17xf32>
    %8 = tpu.matmul %3, %5, %cst {dimension_numbers = #tpu.dot_dimension_numbers<[1], [1], [0], [0], [0, 0, 1, 0], [], []>} : vector<17x8xbf16>, vector<17x8xbf16>, vector<17x17xf32> -> vector<17x17xf32>
    %cst_2 = arith.constant dense<0xFF800000> : vector<17xf32>
    %9 = vector.multi_reduction <maximumf>, %8, %cst_2 [1] : vector<17x17xf32> to vector<17xf32>
    %10 = vector.shape_cast %9 : vector<17xf32> to vector<17x1xf32>
    %11 = vector.broadcast %10 : vector<17x1xf32> to vector<17x17xf32>
    %12 = arith.subf %8, %11 : vector<17x17xf32>
    %13 = math.exp %12 : vector<17x17xf32>
    %cst_3 = arith.constant dense<0.000000e+00> : vector<17xf32>
    %14 = vector.multi_reduction <add>, %13, %cst_3 [1] : vector<17x17xf32> to vector<17xf32>
    %15 = vector.shape_cast %14 : vector<17xf32> to vector<17x1xf32>
    %16 = tpu.reciprocal %15 {approx = true} : vector<17x1xf32> -> vector<17x1xf32>
    %17 = vector.broadcast %16 : vector<17x1xf32> to vector<17x17xf32>
    %18 = arith.mulf %13, %17 : vector<17x17xf32>
    %19 = arith.truncf %18 : vector<17x17xf32> to vector<17x17xbf16>
    %cst_4 = arith.constant dense<0.000000e+00> : vector<17x8xf32>
    %20 = tpu.matmul %19, %7, %cst_4 {dimension_numbers = #tpu.dot_dimension_numbers<[1], [0], [0], [1], [0, 0, 1, 1], [], []>} : vector<17x17xbf16>, vector<17x8xbf16>, vector<17x8xf32> -> vector<17x8xf32>
    %21 = vector.extract_strided_slice %1 {offsets = [0, 8], sizes = [17, 8], strides = [1, 1]} : vector<17x96xf32> to vector<17x8xf32>
    %22 = arith.truncf %21 : vector<17x8xf32> to vector<17x8xbf16>
    %23 = vector.extract_strided_slice %1 {offsets = [0, 40], sizes = [17, 8], strides = [1, 1]} : vector<17x96xf32> to vector<17x8xf32>
    %24 = arith.truncf %23 : vector<17x8xf32> to vector<17x8xbf16>
    %25 = vector.extract_strided_slice %1 {offsets = [0, 72], sizes = [17, 8], strides = [1, 1]} : vector<17x96xf32> to vector<17x8xf32>
    %26 = arith.truncf %25 : vector<17x8xf32> to vector<17x8xbf16>
    %cst_5 = arith.constant dense<0.000000e+00> : vector<17x17xf32>
    %27 = tpu.matmul %22, %24, %cst_5 {dimension_numbers = #tpu.dot_dimension_numbers<[1], [1], [0], [0], [0, 0, 1, 0], [], []>} : vector<17x8xbf16>, vector<17x8xbf16>, vector<17x17xf32> -> vector<17x17xf32>
    %cst_6 = arith.constant dense<0xFF800000> : vector<17xf32>
    %28 = vector.multi_reduction <maximumf>, %27, %cst_6 [1] : vector<17x17xf32> to vector<17xf32>
    %29 = vector.shape_cast %28 : vector<17xf32> to vector<17x1xf32>
    %30 = vector.broadcast %29 : vector<17x1xf32> to vector<17x17xf32>
    %31 = arith.subf %27, %30 : vector<17x17xf32>
    %32 = math.exp %31 : vector<17x17xf32>
    %cst_7 = arith.constant dense<0.000000e+00> : vector<17xf32>
    %33 = vector.multi_reduction <add>, %32, %cst_7 [1] : vector<17x17xf32> to vector<17xf32>
    %34 = vector.shape_cast %33 : vector<17xf32> to vector<17x1xf32>
    %35 = tpu.reciprocal %34 {approx = true} : vector<17x1xf32> -> vector<17x1xf32>
    %36 = vector.broadcast %35 : vector<17x1xf32> to vector<17x17xf32>
    %37 = arith.mulf %32, %36 : vector<17x17xf32>
    %38 = arith.truncf %37 : vector<17x17xf32> to vector<17x17xbf16>
    %cst_8 = arith.constant dense<0.000000e+00> : vector<17x8xf32>
    %39 = tpu.matmul %38, %26, %cst_8 {dimension_numbers = #tpu.dot_dimension_numbers<[1], [0], [0], [1], [0, 0, 1, 1], [], []>} : vector<17x17xbf16>, vector<17x8xbf16>, vector<17x8xf32> -> vector<17x8xf32>
    %40 = vector.extract_strided_slice %1 {offsets = [0, 16], sizes = [17, 8], strides = [1, 1]} : vector<17x96xf32> to vector<17x8xf32>
    %41 = arith.truncf %40 : vector<17x8xf32> to vector<17x8xbf16>
    %42 = vector.extract_strided_slice %1 {offsets = [0, 48], sizes = [17, 8], strides = [1, 1]} : vector<17x96xf32> to vector<17x8xf32>
    %43 = arith.truncf %42 : vector<17x8xf32> to vector<17x8xbf16>
    %44 = vector.extract_strided_slice %1 {offsets = [0, 80], sizes = [17, 8], strides = [1, 1]} : vector<17x96xf32> to vector<17x8xf32>
    %45 = arith.truncf %44 : vector<17x8xf32> to vector<17x8xbf16>
    %cst_9 = arith.constant dense<0.000000e+00> : vector<17x17xf32>
    %46 = tpu.matmul %41, %43, %cst_9 {dimension_numbers = #tpu.dot_dimension_numbers<[1], [1], [0], [0], [0, 0, 1, 0], [], []>} : vector<17x8xbf16>, vector<17x8xbf16>, vector<17x17xf32> -> vector<17x17xf32>
    %cst_10 = arith.constant dense<0xFF800000> : vector<17xf32>
    %47 = vector.multi_reduction <maximumf>, %46, %cst_10 [1] : vector<17x17xf32> to vector<17xf32>
    %48 = vector.shape_cast %47 : vector<17xf32> to vector<17x1xf32>
    %49 = vector.broadcast %48 : vector<17x1xf32> to vector<17x17xf32>
    %50 = arith.subf %46, %49 : vector<17x17xf32>
    %51 = math.exp %50 : vector<17x17xf32>
    %cst_11 = arith.constant dense<0.000000e+00> : vector<17xf32>
    %52 = vector.multi_reduction <add>, %51, %cst_11 [1] : vector<17x17xf32> to vector<17xf32>
    %53 = vector.shape_cast %52 : vector<17xf32> to vector<17x1xf32>
    %54 = tpu.reciprocal %53 {approx = true} : vector<17x1xf32> -> vector<17x1xf32>
    %55 = vector.broadcast %54 : vector<17x1xf32> to vector<17x17xf32>
    %56 = arith.mulf %51, %55 : vector<17x17xf32>
    %57 = arith.truncf %56 : vector<17x17xf32> to vector<17x17xbf16>
    %cst_12 = arith.constant dense<0.000000e+00> : vector<17x8xf32>
    %58 = tpu.matmul %57, %45, %cst_12 {dimension_numbers = #tpu.dot_dimension_numbers<[1], [0], [0], [1], [0, 0, 1, 1], [], []>} : vector<17x17xbf16>, vector<17x8xbf16>, vector<17x8xf32> -> vector<17x8xf32>
    %59 = vector.extract_strided_slice %1 {offsets = [0, 24], sizes = [17, 8], strides = [1, 1]} : vector<17x96xf32> to vector<17x8xf32>
    %60 = arith.truncf %59 : vector<17x8xf32> to vector<17x8xbf16>
    %61 = vector.extract_strided_slice %1 {offsets = [0, 56], sizes = [17, 8], strides = [1, 1]} : vector<17x96xf32> to vector<17x8xf32>
    %62 = arith.truncf %61 : vector<17x8xf32> to vector<17x8xbf16>
    %63 = vector.extract_strided_slice %1 {offsets = [0, 88], sizes = [17, 8], strides = [1, 1]} : vector<17x96xf32> to vector<17x8xf32>
    %64 = arith.truncf %63 : vector<17x8xf32> to vector<17x8xbf16>
    %cst_13 = arith.constant dense<0.000000e+00> : vector<17x17xf32>
    %65 = tpu.matmul %60, %62, %cst_13 {dimension_numbers = #tpu.dot_dimension_numbers<[1], [1], [0], [0], [0, 0, 1, 0], [], []>} : vector<17x8xbf16>, vector<17x8xbf16>, vector<17x17xf32> -> vector<17x17xf32>
    %cst_14 = arith.constant dense<0xFF800000> : vector<17xf32>
    %66 = vector.multi_reduction <maximumf>, %65, %cst_14 [1] : vector<17x17xf32> to vector<17xf32>
    %67 = vector.shape_cast %66 : vector<17xf32> to vector<17x1xf32>
    %68 = vector.broadcast %67 : vector<17x1xf32> to vector<17x17xf32>
    %69 = arith.subf %65, %68 : vector<17x17xf32>
    %70 = math.exp %69 : vector<17x17xf32>
    %cst_15 = arith.constant dense<0.000000e+00> : vector<17xf32>
    %71 = vector.multi_reduction <add>, %70, %cst_15 [1] : vector<17x17xf32> to vector<17xf32>
    %72 = vector.shape_cast %71 : vector<17xf32> to vector<17x1xf32>
    %73 = tpu.reciprocal %72 {approx = true} : vector<17x1xf32> -> vector<17x1xf32>
    %74 = vector.broadcast %73 : vector<17x1xf32> to vector<17x17xf32>
    %75 = arith.mulf %70, %74 : vector<17x17xf32>
    %76 = arith.truncf %75 : vector<17x17xf32> to vector<17x17xbf16>
    %cst_16 = arith.constant dense<0.000000e+00> : vector<17x8xf32>
    %77 = tpu.matmul %76, %64, %cst_16 {dimension_numbers = #tpu.dot_dimension_numbers<[1], [0], [0], [1], [0, 0, 1, 1], [], []>} : vector<17x17xbf16>, vector<17x8xbf16>, vector<17x8xf32> -> vector<17x8xf32>
    %78 = tpu.concatenate %20, %39, %58, %77 in 1 : vector<17x8xf32>, vector<17x8xf32>, vector<17x8xf32>, vector<17x8xf32> -> vector<17x32xf32>
    %c0_17 = arith.constant 0 : index
    %c0_18 = arith.constant 0 : index
    %c0_19 = arith.constant 0 : index
    %79 = vector.load %arg2[%c0_17, %c0_18, %c0_19] : memref<1x17x32xf32, #tpu.memory_space<vmem>>, vector<1x17x32xf32>
    %80 = vector.shape_cast %79 : vector<1x17x32xf32> to vector<17x32xf32>
    %81 = vector.shape_cast %78 : vector<17x32xf32> to vector<1x17x32xf32>
    tpu.vector_store %arg2[%c0_17, %c0_18, %c0_19], %81 {strides = array<i32>} : memref<1x17x32xf32, #tpu.memory_space<vmem>>, vector<1x17x32xf32>,
    return
  }
  func.func @transform_0(%arg0: i32) -> (i32, i32, i32) {
    %c0_i32 = arith.constant 0 : i32
    %c0_i32_0 = arith.constant 0 : i32
    %c0_i32_1 = arith.constant 0 : i32
    return %arg0, %c0_i32, %c0_i32_0 : i32, i32, i32
  }
  func.func @transform_1(%arg0: i32) -> (i32, i32, i32) {
    %c0_i32 = arith.constant 0 : i32
    %c0_i32_0 = arith.constant 0 : i32
    %c0_i32_1 = arith.constant 0 : i32
    return %arg0, %c0_i32, %c0_i32_0 : i32, i32, i32
  }
}

module attributes {stable_mosaic.version = 11 : i64} {
  func.func @_linear_kernel(%arg0: i32, %arg1: i32, %arg2: memref<34x32xf32, #tpu.memory_space<vmem>>, %arg3: memref<32x96xbf16, #tpu.memory_space<vmem>>, %arg4: memref<1x96xf32, #tpu.memory_space<vmem>>, %arg5: memref<1x32xf32, #tpu.memory_space<vmem>>, %arg6: memref<1x32xf32, #tpu.memory_space<vmem>>, %arg7: memref<34x96xf32, #tpu.memory_space<vmem>>) attributes {dimension_semantics = [#tpu.dimension_semantics<parallel>, #tpu.dimension_semantics<parallel>], iteration_bounds = array<i64: 1, 1>, scalar_prefetch = 0 : i64, scratch_operands = 0 : i64, tpu.core_type = #tpu.core_type<tc>, window_params = [{transform_indices = @transform_0, window_bounds = array<i64: 34, 32>}, {transform_indices = @transform_1, window_bounds = array<i64: 32, 96>}, {transform_indices = @transform_2, window_bounds = array<i64: 1, 96>}, {pipeline_mode = #tpu.pipeline_mode<synchronous>, transform_indices = @transform_3, window_bounds = array<i64: 1, 32>}, {pipeline_mode = #tpu.pipeline_mode<synchronous>, transform_indices = @transform_4, window_bounds = array<i64: 1, 32>}, {transform_indices = @transform_5, window_bounds = array<i64: 34, 96>}]} {
    %c0 = arith.constant 0 : index
    %c0_0 = arith.constant 0 : index
    %0 = vector.load %arg2[%c0, %c0_0] : memref<34x32xf32, #tpu.memory_space<vmem>>, vector<34x32xf32>
    %cst = arith.constant dense<0.000000e+00> : vector<34xf32>
    %1 = vector.multi_reduction <add>, %0, %cst [1] : vector<34x32xf32> to vector<34xf32>
    %2 = vector.shape_cast %1 : vector<34xf32> to vector<34x1xf32>
    %cst_1 = arith.constant 3.200000e+01 : f32
    %3 = vector.broadcast %cst_1 : f32 to vector<34x1xf32>
    %4 = arith.divf %2, %3 : vector<34x1xf32>
    %5 = vector.broadcast %4 : vector<34x1xf32> to vector<34x32xf32>
    %6 = arith.subf %0, %5 : vector<34x32xf32>
    %7 = arith.mulf %6, %6 : vector<34x32xf32>
    %cst_2 = arith.constant dense<0.000000e+00> : vector<34xf32>
    %8 = vector.multi_reduction <add>, %7, %cst_2 [1] : vector<34x32xf32> to vector<34xf32>
    %9 = vector.shape_cast %8 : vector<34xf32> to vector<34x1xf32>
    %cst_3 = arith.constant 3.200000e+01 : f32
    %10 = vector.broadcast %cst_3 : f32 to vector<34x1xf32>
    %11 = arith.divf %9, %10 : vector<34x1xf32>
    %12 = vector.broadcast %4 : vector<34x1xf32> to vector<34x32xf32>
    %13 = arith.subf %0, %12 : vector<34x32xf32>
    %cst_4 = arith.constant 9.99999974E-6 : f32
    %14 = vector.broadcast %cst_4 : f32 to vector<34x1xf32>
    %15 = arith.addf %11, %14 : vector<34x1xf32>
    %16 = math.rsqrt %15 : vector<34x1xf32>
    %17 = vector.broadcast %16 : vector<34x1xf32> to vector<34x32xf32>
    %18 = arith.mulf %13, %17 : vector<34x32xf32>
    %c0_5 = arith.constant 0 : index
    %c0_6 = arith.constant 0 : index
    %19 = vector.load %arg5[%c0_5, %c0_6] : memref<1x32xf32, #tpu.memory_space<vmem>>, vector<1x32xf32>
    %20 = vector.broadcast %19 : vector<1x32xf32> to vector<34x32xf32>
    %21 = arith.mulf %18, %20 : vector<34x32xf32>
    %c0_7 = arith.constant 0 : index
    %c0_8 = arith.constant 0 : index
    %22 = vector.load %arg6[%c0_7, %c0_8] : memref<1x32xf32, #tpu.memory_space<vmem>>, vector<1x32xf32>
    %23 = vector.broadcast %22 : vector<1x32xf32> to vector<34x32xf32>
    %24 = arith.addf %21, %23 : vector<34x32xf32>
    %25 = arith.truncf %24 : vector<34x32xf32> to vector<34x32xbf16>
    %c0_9 = arith.constant 0 : index
    %c0_10 = arith.constant 0 : index
    %26 = vector.load %arg3[%c0_9, %c0_10] : memref<32x96xbf16, #tpu.memory_space<vmem>>, vector<32x96xbf16>
    %cst_11 = arith.constant dense<0.000000e+00> : vector<34x96xf32>
    %27 = tpu.matmul %25, %26, %cst_11 {dimension_numbers = #tpu.dot_dimension_numbers<[1], [0], [0], [1], [0, 0, 1, 1], [], []>} : vector<34x32xbf16>, vector<32x96xbf16>, vector<34x96xf32> -> vector<34x96xf32>
    %c0_12 = arith.constant 0 : index
    %c0_13 = arith.constant 0 : index
    %28 = vector.load %arg4[%c0_12, %c0_13] : memref<1x96xf32, #tpu.memory_space<vmem>>, vector<1x96xf32>
    %29 = vector.broadcast %28 : vector<1x96xf32> to vector<34x96xf32>
    %30 = arith.addf %27, %29 : vector<34x96xf32>
    %c0_14 = arith.constant 0 : index
    %c0_15 = arith.constant 0 : index
    %31 = vector.load %arg7[%c0_14, %c0_15] : memref<34x96xf32, #tpu.memory_space<vmem>>, vector<34x96xf32>
    tpu.vector_store %arg7[%c0_14, %c0_15], %30 {strides = array<i32>} : memref<34x96xf32, #tpu.memory_space<vmem>>, vector<34x96xf32>,
    return
  }
  func.func @transform_0(%arg0: i32, %arg1: i32) -> (i32, i32) {
    %c0_i32 = arith.constant 0 : i32
    %c0_i32_0 = arith.constant 0 : i32
    return %arg0, %c0_i32 : i32, i32
  }
  func.func @transform_1(%arg0: i32, %arg1: i32) -> (i32, i32) {
    %c0_i32 = arith.constant 0 : i32
    %c0_i32_0 = arith.constant 0 : i32
    return %c0_i32, %arg1 : i32, i32
  }
  func.func @transform_2(%arg0: i32, %arg1: i32) -> (i32, i32) {
    %c0_i32 = arith.constant 0 : i32
    %c0_i32_0 = arith.constant 0 : i32
    return %c0_i32, %arg1 : i32, i32
  }
  func.func @transform_3(%arg0: i32, %arg1: i32) -> (i32, i32) {
    %c0_i32 = arith.constant 0 : i32
    %c0_i32_0 = arith.constant 0 : i32
    %c0_i32_1 = arith.constant 0 : i32
    return %c0_i32, %c0_i32_0 : i32, i32
  }
  func.func @transform_4(%arg0: i32, %arg1: i32) -> (i32, i32) {
    %c0_i32 = arith.constant 0 : i32
    %c0_i32_0 = arith.constant 0 : i32
    %c0_i32_1 = arith.constant 0 : i32
    return %c0_i32, %c0_i32_0 : i32, i32
  }
  func.func @transform_5(%arg0: i32, %arg1: i32) -> (i32, i32) {
    %c0_i32 = arith.constant 0 : i32
    return %arg0, %arg1 : i32, i32
  }
}

module attributes {stable_mosaic.version = 11 : i64} {
  func.func @_linear_kernel(%arg0: i32, %arg1: i32, %arg2: memref<34x32xf32, #tpu.memory_space<vmem>>, %arg3: memref<32x32xbf16, #tpu.memory_space<vmem>>, %arg4: memref<1x32xf32, #tpu.memory_space<vmem>>, %arg5: memref<34x32xf32, #tpu.memory_space<vmem>>, %arg6: memref<34x32xf32, #tpu.memory_space<vmem>>) attributes {dimension_semantics = [#tpu.dimension_semantics<parallel>, #tpu.dimension_semantics<parallel>], iteration_bounds = array<i64: 1, 1>, scalar_prefetch = 0 : i64, scratch_operands = 0 : i64, tpu.core_type = #tpu.core_type<tc>, window_params = [{transform_indices = @transform_0, window_bounds = array<i64: 34, 32>}, {transform_indices = @transform_1, window_bounds = array<i64: 32, 32>}, {transform_indices = @transform_2, window_bounds = array<i64: 1, 32>}, {transform_indices = @transform_3, window_bounds = array<i64: 34, 32>}, {transform_indices = @transform_4, window_bounds = array<i64: 34, 32>}]} {
    %c0 = arith.constant 0 : index
    %c0_0 = arith.constant 0 : index
    %0 = vector.load %arg2[%c0, %c0_0] : memref<34x32xf32, #tpu.memory_space<vmem>>, vector<34x32xf32>
    %1 = arith.truncf %0 : vector<34x32xf32> to vector<34x32xbf16>
    %c0_1 = arith.constant 0 : index
    %c0_2 = arith.constant 0 : index
    %2 = vector.load %arg3[%c0_1, %c0_2] : memref<32x32xbf16, #tpu.memory_space<vmem>>, vector<32x32xbf16>
    %cst = arith.constant dense<0.000000e+00> : vector<34x32xf32>
    %3 = tpu.matmul %1, %2, %cst {dimension_numbers = #tpu.dot_dimension_numbers<[1], [0], [0], [1], [0, 0, 1, 1], [], []>} : vector<34x32xbf16>, vector<32x32xbf16>, vector<34x32xf32> -> vector<34x32xf32>
    %c0_3 = arith.constant 0 : index
    %c0_4 = arith.constant 0 : index
    %4 = vector.load %arg4[%c0_3, %c0_4] : memref<1x32xf32, #tpu.memory_space<vmem>>, vector<1x32xf32>
    %5 = vector.broadcast %4 : vector<1x32xf32> to vector<34x32xf32>
    %6 = arith.addf %3, %5 : vector<34x32xf32>
    %c0_5 = arith.constant 0 : index
    %c0_6 = arith.constant 0 : index
    %7 = vector.load %arg5[%c0_5, %c0_6] : memref<34x32xf32, #tpu.memory_space<vmem>>, vector<34x32xf32>
    %8 = arith.addf %6, %7 : vector<34x32xf32>
    %c0_7 = arith.constant 0 : index
    %c0_8 = arith.constant 0 : index
    %9 = vector.load %arg6[%c0_7, %c0_8] : memref<34x32xf32, #tpu.memory_space<vmem>>, vector<34x32xf32>
    tpu.vector_store %arg6[%c0_7, %c0_8], %8 {strides = array<i32>} : memref<34x32xf32, #tpu.memory_space<vmem>>, vector<34x32xf32>,
    return
  }
  func.func @transform_0(%arg0: i32, %arg1: i32) -> (i32, i32) {
    %c0_i32 = arith.constant 0 : i32
    %c0_i32_0 = arith.constant 0 : i32
    return %arg0, %c0_i32 : i32, i32
  }
  func.func @transform_1(%arg0: i32, %arg1: i32) -> (i32, i32) {
    %c0_i32 = arith.constant 0 : i32
    %c0_i32_0 = arith.constant 0 : i32
    return %c0_i32, %arg1 : i32, i32
  }
  func.func @transform_2(%arg0: i32, %arg1: i32) -> (i32, i32) {
    %c0_i32 = arith.constant 0 : i32
    %c0_i32_0 = arith.constant 0 : i32
    return %c0_i32, %arg1 : i32, i32
  }
  func.func @transform_3(%arg0: i32, %arg1: i32) -> (i32, i32) {
    %c0_i32 = arith.constant 0 : i32
    return %arg0, %arg1 : i32, i32
  }
  func.func @transform_4(%arg0: i32, %arg1: i32) -> (i32, i32) {
    %c0_i32 = arith.constant 0 : i32
    return %arg0, %arg1 : i32, i32
  }
}

module attributes {stable_mosaic.version = 11 : i64} {
  func.func @_linear_kernel(%arg0: i32, %arg1: i32, %arg2: memref<34x32xf32, #tpu.memory_space<vmem>>, %arg3: memref<32x128xbf16, #tpu.memory_space<vmem>>, %arg4: memref<1x128xf32, #tpu.memory_space<vmem>>, %arg5: memref<1x32xf32, #tpu.memory_space<vmem>>, %arg6: memref<1x32xf32, #tpu.memory_space<vmem>>, %arg7: memref<34x128xf32, #tpu.memory_space<vmem>>) attributes {dimension_semantics = [#tpu.dimension_semantics<parallel>, #tpu.dimension_semantics<parallel>], iteration_bounds = array<i64: 1, 1>, scalar_prefetch = 0 : i64, scratch_operands = 0 : i64, tpu.core_type = #tpu.core_type<tc>, window_params = [{transform_indices = @transform_0, window_bounds = array<i64: 34, 32>}, {transform_indices = @transform_1, window_bounds = array<i64: 32, 128>}, {transform_indices = @transform_2, window_bounds = array<i64: 1, 128>}, {pipeline_mode = #tpu.pipeline_mode<synchronous>, transform_indices = @transform_3, window_bounds = array<i64: 1, 32>}, {pipeline_mode = #tpu.pipeline_mode<synchronous>, transform_indices = @transform_4, window_bounds = array<i64: 1, 32>}, {transform_indices = @transform_5, window_bounds = array<i64: 34, 128>}]} {
    %c0 = arith.constant 0 : index
    %c0_0 = arith.constant 0 : index
    %0 = vector.load %arg2[%c0, %c0_0] : memref<34x32xf32, #tpu.memory_space<vmem>>, vector<34x32xf32>
    %cst = arith.constant dense<0.000000e+00> : vector<34xf32>
    %1 = vector.multi_reduction <add>, %0, %cst [1] : vector<34x32xf32> to vector<34xf32>
    %2 = vector.shape_cast %1 : vector<34xf32> to vector<34x1xf32>
    %cst_1 = arith.constant 3.200000e+01 : f32
    %3 = vector.broadcast %cst_1 : f32 to vector<34x1xf32>
    %4 = arith.divf %2, %3 : vector<34x1xf32>
    %5 = vector.broadcast %4 : vector<34x1xf32> to vector<34x32xf32>
    %6 = arith.subf %0, %5 : vector<34x32xf32>
    %7 = arith.mulf %6, %6 : vector<34x32xf32>
    %cst_2 = arith.constant dense<0.000000e+00> : vector<34xf32>
    %8 = vector.multi_reduction <add>, %7, %cst_2 [1] : vector<34x32xf32> to vector<34xf32>
    %9 = vector.shape_cast %8 : vector<34xf32> to vector<34x1xf32>
    %cst_3 = arith.constant 3.200000e+01 : f32
    %10 = vector.broadcast %cst_3 : f32 to vector<34x1xf32>
    %11 = arith.divf %9, %10 : vector<34x1xf32>
    %12 = vector.broadcast %4 : vector<34x1xf32> to vector<34x32xf32>
    %13 = arith.subf %0, %12 : vector<34x32xf32>
    %cst_4 = arith.constant 9.99999974E-6 : f32
    %14 = vector.broadcast %cst_4 : f32 to vector<34x1xf32>
    %15 = arith.addf %11, %14 : vector<34x1xf32>
    %16 = math.rsqrt %15 : vector<34x1xf32>
    %17 = vector.broadcast %16 : vector<34x1xf32> to vector<34x32xf32>
    %18 = arith.mulf %13, %17 : vector<34x32xf32>
    %c0_5 = arith.constant 0 : index
    %c0_6 = arith.constant 0 : index
    %19 = vector.load %arg5[%c0_5, %c0_6] : memref<1x32xf32, #tpu.memory_space<vmem>>, vector<1x32xf32>
    %20 = vector.broadcast %19 : vector<1x32xf32> to vector<34x32xf32>
    %21 = arith.mulf %18, %20 : vector<34x32xf32>
    %c0_7 = arith.constant 0 : index
    %c0_8 = arith.constant 0 : index
    %22 = vector.load %arg6[%c0_7, %c0_8] : memref<1x32xf32, #tpu.memory_space<vmem>>, vector<1x32xf32>
    %23 = vector.broadcast %22 : vector<1x32xf32> to vector<34x32xf32>
    %24 = arith.addf %21, %23 : vector<34x32xf32>
    %25 = arith.truncf %24 : vector<34x32xf32> to vector<34x32xbf16>
    %c0_9 = arith.constant 0 : index
    %c0_10 = arith.constant 0 : index
    %26 = vector.load %arg3[%c0_9, %c0_10] : memref<32x128xbf16, #tpu.memory_space<vmem>>, vector<32x128xbf16>
    %cst_11 = arith.constant dense<0.000000e+00> : vector<34x128xf32>
    %27 = tpu.matmul %25, %26, %cst_11 {dimension_numbers = #tpu.dot_dimension_numbers<[1], [0], [0], [1], [0, 0, 1, 1], [], []>} : vector<34x32xbf16>, vector<32x128xbf16>, vector<34x128xf32> -> vector<34x128xf32>
    %c0_12 = arith.constant 0 : index
    %c0_13 = arith.constant 0 : index
    %28 = vector.load %arg4[%c0_12, %c0_13] : memref<1x128xf32, #tpu.memory_space<vmem>>, vector<1x128xf32>
    %29 = vector.broadcast %28 : vector<1x128xf32> to vector<34x128xf32>
    %30 = arith.addf %27, %29 : vector<34x128xf32>
    %cst_14 = arith.constant 1.702000e+00 : f32
    %31 = vector.broadcast %cst_14 : f32 to vector<34x128xf32>
    %32 = arith.mulf %31, %30 : vector<34x128xf32>
    %33 = arith.negf %32 : vector<34x128xf32>
    %34 = math.exp %33 : vector<34x128xf32>
    %cst_15 = arith.constant 1.000000e+00 : f32
    %35 = vector.broadcast %cst_15 : f32 to vector<34x128xf32>
    %36 = arith.addf %35, %34 : vector<34x128xf32>
    %37 = arith.divf %35, %36 : vector<34x128xf32>
    %38 = arith.mulf %30, %37 : vector<34x128xf32>
    %c0_16 = arith.constant 0 : index
    %c0_17 = arith.constant 0 : index
    %39 = vector.load %arg7[%c0_16, %c0_17] : memref<34x128xf32, #tpu.memory_space<vmem>>, vector<34x128xf32>
    tpu.vector_store %arg7[%c0_16, %c0_17], %38 {strides = array<i32>} : memref<34x128xf32, #tpu.memory_space<vmem>>, vector<34x128xf32>,
    return
  }
  func.func @transform_0(%arg0: i32, %arg1: i32) -> (i32, i32) {
    %c0_i32 = arith.constant 0 : i32
    %c0_i32_0 = arith.constant 0 : i32
    return %arg0, %c0_i32 : i32, i32
  }
  func.func @transform_1(%arg0: i32, %arg1: i32) -> (i32, i32) {
    %c0_i32 = arith.constant 0 : i32
    %c0_i32_0 = arith.constant 0 : i32
    return %c0_i32, %arg1 : i32, i32
  }
  func.func @transform_2(%arg0: i32, %arg1: i32) -> (i32, i32) {
    %c0_i32 = arith.constant 0 : i32
    %c0_i32_0 = arith.constant 0 : i32
    return %c0_i32, %arg1 : i32, i32
  }
  func.func @transform_3(%arg0: i32, %arg1: i32) -> (i32, i32) {
    %c0_i32 = arith.constant 0 : i32
    %c0_i32_0 = arith.constant 0 : i32
    %c0_i32_1 = arith.constant 0 : i32
    return %c0_i32, %c0_i32_0 : i32, i32
  }
  func.func @transform_4(%arg0: i32, %arg1: i32) -> (i32, i32) {
    %c0_i32 = arith.constant 0 : i32
    %c0_i32_0 = arith.constant 0 : i32
    %c0_i32_1 = arith.constant 0 : i32
    return %c0_i32, %c0_i32_0 : i32, i32
  }
  func.func @transform_5(%arg0: i32, %arg1: i32) -> (i32, i32) {
    %c0_i32 = arith.constant 0 : i32
    return %arg0, %arg1 : i32, i32
  }
}

module attributes {stable_mosaic.version = 11 : i64} {
  func.func @_linear_kernel(%arg0: i32, %arg1: i32, %arg2: memref<34x128xf32, #tpu.memory_space<vmem>>, %arg3: memref<128x32xbf16, #tpu.memory_space<vmem>>, %arg4: memref<1x32xf32, #tpu.memory_space<vmem>>, %arg5: memref<34x32xf32, #tpu.memory_space<vmem>>, %arg6: memref<34x32xf32, #tpu.memory_space<vmem>>) attributes {dimension_semantics = [#tpu.dimension_semantics<parallel>, #tpu.dimension_semantics<parallel>], iteration_bounds = array<i64: 1, 1>, scalar_prefetch = 0 : i64, scratch_operands = 0 : i64, tpu.core_type = #tpu.core_type<tc>, window_params = [{transform_indices = @transform_0, window_bounds = array<i64: 34, 128>}, {transform_indices = @transform_1, window_bounds = array<i64: 128, 32>}, {transform_indices = @transform_2, window_bounds = array<i64: 1, 32>}, {transform_indices = @transform_3, window_bounds = array<i64: 34, 32>}, {transform_indices = @transform_4, window_bounds = array<i64: 34, 32>}]} {
    %c0 = arith.constant 0 : index
    %c0_0 = arith.constant 0 : index
    %0 = vector.load %arg2[%c0, %c0_0] : memref<34x128xf32, #tpu.memory_space<vmem>>, vector<34x128xf32>
    %1 = arith.truncf %0 : vector<34x128xf32> to vector<34x128xbf16>
    %c0_1 = arith.constant 0 : index
    %c0_2 = arith.constant 0 : index
    %2 = vector.load %arg3[%c0_1, %c0_2] : memref<128x32xbf16, #tpu.memory_space<vmem>>, vector<128x32xbf16>
    %cst = arith.constant dense<0.000000e+00> : vector<34x32xf32>
    %3 = tpu.matmul %1, %2, %cst {dimension_numbers = #tpu.dot_dimension_numbers<[1], [0], [0], [1], [0, 0, 1, 1], [], []>} : vector<34x128xbf16>, vector<128x32xbf16>, vector<34x32xf32> -> vector<34x32xf32>
    %c0_3 = arith.constant 0 : index
    %c0_4 = arith.constant 0 : index
    %4 = vector.load %arg4[%c0_3, %c0_4] : memref<1x32xf32, #tpu.memory_space<vmem>>, vector<1x32xf32>
    %5 = vector.broadcast %4 : vector<1x32xf32> to vector<34x32xf32>
    %6 = arith.addf %3, %5 : vector<34x32xf32>
    %c0_5 = arith.constant 0 : index
    %c0_6 = arith.constant 0 : index
    %7 = vector.load %arg5[%c0_5, %c0_6] : memref<34x32xf32, #tpu.memory_space<vmem>>, vector<34x32xf32>
    %8 = arith.addf %6, %7 : vector<34x32xf32>
    %c0_7 = arith.constant 0 : index
    %c0_8 = arith.constant 0 : index
    %9 = vector.load %arg6[%c0_7, %c0_8] : memref<34x32xf32, #tpu.memory_space<vmem>>, vector<34x32xf32>
    tpu.vector_store %arg6[%c0_7, %c0_8], %8 {strides = array<i32>} : memref<34x32xf32, #tpu.memory_space<vmem>>, vector<34x32xf32>,
    return
  }
  func.func @transform_0(%arg0: i32, %arg1: i32) -> (i32, i32) {
    %c0_i32 = arith.constant 0 : i32
    %c0_i32_0 = arith.constant 0 : i32
    return %arg0, %c0_i32 : i32, i32
  }
  func.func @transform_1(%arg0: i32, %arg1: i32) -> (i32, i32) {
    %c0_i32 = arith.constant 0 : i32
    %c0_i32_0 = arith.constant 0 : i32
    return %c0_i32, %arg1 : i32, i32
  }
  func.func @transform_2(%arg0: i32, %arg1: i32) -> (i32, i32) {
    %c0_i32 = arith.constant 0 : i32
    %c0_i32_0 = arith.constant 0 : i32
    return %c0_i32, %arg1 : i32, i32
  }
  func.func @transform_3(%arg0: i32, %arg1: i32) -> (i32, i32) {
    %c0_i32 = arith.constant 0 : i32
    return %arg0, %arg1 : i32, i32
  }
  func.func @transform_4(%arg0: i32, %arg1: i32) -> (i32, i32) {
    %c0_i32 = arith.constant 0 : i32
    return %arg0, %arg1 : i32, i32
  }
}

module attributes {stable_mosaic.version = 11 : i64} {
  func.func @_linear_kernel(%arg0: i32, %arg1: i32, %arg2: memref<2x32xf32, #tpu.memory_space<vmem>>, %arg3: memref<32x16xbf16, #tpu.memory_space<vmem>>, %arg4: memref<2x16xf32, #tpu.memory_space<vmem>>) attributes {dimension_semantics = [#tpu.dimension_semantics<parallel>, #tpu.dimension_semantics<parallel>], iteration_bounds = array<i64: 1, 1>, scalar_prefetch = 0 : i64, scratch_operands = 0 : i64, tpu.core_type = #tpu.core_type<tc>, window_params = [{transform_indices = @transform_0, window_bounds = array<i64: 2, 32>}, {transform_indices = @transform_1, window_bounds = array<i64: 32, 16>}, {transform_indices = @transform_2, window_bounds = array<i64: 2, 16>}]} {
    %c0 = arith.constant 0 : index
    %c0_0 = arith.constant 0 : index
    %0 = vector.load %arg2[%c0, %c0_0] : memref<2x32xf32, #tpu.memory_space<vmem>>, vector<2x32xf32>
    %1 = arith.truncf %0 : vector<2x32xf32> to vector<2x32xbf16>
    %c0_1 = arith.constant 0 : index
    %c0_2 = arith.constant 0 : index
    %2 = vector.load %arg3[%c0_1, %c0_2] : memref<32x16xbf16, #tpu.memory_space<vmem>>, vector<32x16xbf16>
    %cst = arith.constant dense<0.000000e+00> : vector<2x16xf32>
    %3 = tpu.matmul %1, %2, %cst {dimension_numbers = #tpu.dot_dimension_numbers<[1], [0], [0], [1], [0, 0, 1, 1], [], []>} : vector<2x32xbf16>, vector<32x16xbf16>, vector<2x16xf32> -> vector<2x16xf32>
    %c0_3 = arith.constant 0 : index
    %c0_4 = arith.constant 0 : index
    %4 = vector.load %arg4[%c0_3, %c0_4] : memref<2x16xf32, #tpu.memory_space<vmem>>, vector<2x16xf32>
    tpu.vector_store %arg4[%c0_3, %c0_4], %3 {strides = array<i32>} : memref<2x16xf32, #tpu.memory_space<vmem>>, vector<2x16xf32>,
    return
  }
  func.func @transform_0(%arg0: i32, %arg1: i32) -> (i32, i32) {
    %c0_i32 = arith.constant 0 : i32
    %c0_i32_0 = arith.constant 0 : i32
    return %arg0, %c0_i32 : i32, i32
  }
  func.func @transform_1(%arg0: i32, %arg1: i32) -> (i32, i32) {
    %c0_i32 = arith.constant 0 : i32
    %c0_i32_0 = arith.constant 0 : i32
    return %c0_i32, %arg1 : i32, i32
  }
  func.func @transform_2(%arg0: i32, %arg1: i32) -> (i32, i32) {
    %c0_i32 = arith.constant 0 : i32
    return %arg0, %arg1 : i32, i32
  }
}

</mosaic_0001>

<llo_original>
// kernel: visual_encoder_forward.14
$region0: #{visual_encoder_forward.14}
  #allocation0 [shape = 'u32[]', space=smem, size = 0x4, offset = 0x4, fixed_abs, tag = 'smem constant byte address 0x4 - core index']
  #allocation1 [shape = 'u32[144,128]{1,0:T(1,128)}', space=vmem, size = 0x12000, scoped, tag = 'internal scratch']
  %s0 = inlined_call_operand.vmem [shape: f32[32,48], index: 0, kind: input, shape index: {}]
  %s1 = inlined_call_operand.vmem [shape: bf16[48,32], index: 1, kind: input, shape index: {}]
  %s2 = inlined_call_operand.vmem [shape: f32[32,32], index: 2, kind: output, shape index: {}]
  %s3 = sld [smem:[#allocation0]]
  $region18: #{visual_encoder_forward.14} parent=0
    _
  %s5 = ssub.s32 1, %s3
  %s6 = scalar_select 0, %s5, %s3
  // Predicated region
  $region2: #{visual_encoder_forward.14} parent=0 // pred_check
    _
  $region3: #{visual_encoder_forward.14} parent=0 // pred_check_branch
    %8 = sbr.rel (0) target = $region5
  $region4: #{visual_encoder_forward.14} parent=0 // pred_region
    _
  $region5: #{visual_encoder_forward.14} parent=0 // pred_fallthru
    _
  // Predicated region
  $region6: #{visual_encoder_forward.14} parent=0 // pred_check
    _
  $region7: #{visual_encoder_forward.14} parent=0 // pred_check_branch
    %10 = sbr.rel (0) target = $region9
  $region8: #{visual_encoder_forward.14} parent=0 // pred_region
    _
  $region9: #{visual_encoder_forward.14} parent=0 // pred_fallthru
    _
  %v12 = vld [vmem:[%s0] sm:$0xff]
  %v13 = vld [vmem:[%s0 + $0x8] sm:$0xff]
  %v14 = vld [vmem:[%s0 + $0x10] sm:$0xff]
  %v15 = vld [vmem:[%s0 + $0x18] sm:$0xff]
  %v16 = vpack.c.bf16 %v13, %v12
  %v17 = vpack.c.bf16 %v15, %v14
  %v18 = vld [vmem:[%s1] sm:$0xf]
  %v19 = vld [vmem:[%s1 + $0x4] sm:$0xf]
  %v20 = vld [vmem:[%s1 + $0x8] sm:$0xf]
  %v21 = vld [vmem:[%s1 + $0xc] sm:$0xf]
  %v22 = vld [vmem:[%s1 + $0x10] sm:$0xf]
  %v23 = vld [vmem:[%s1 + $0x14] sm:$0xf]
  %v30 = vunpack.c.l.b16 %v18
  %v31 = vunpack.c.l.b16 %v19
  %v32 = vunpack.c.l.b16 %v20
  %v33 = vunpack.c.l.b16 %v21
  %v34 = vunpack.c.l.b16 %v22
  %v35 = vunpack.c.l.b16 %v23
  %v36 = vpack.c.b16 %v31, %v30
  %v37 = vpack.c.b16 %v33, %v32
  %v38 = vpack.c.b16 %v35, %v34
  %vm42 = vcmask 392192
  %v44 = vsel %vm42, %v16, 0
  %v47 = vsel %vm42, %v17, 0
  %49 = vmatprep.subr.bf16.mxu0 0
  %50 = vmatpush1.bf16.msra.mxu0 0
  %51 = vmatprep.subr.bf16.mxu0 0
  %52 = vmatpush1.bf16.msra.mxu0 0
  %53 = vmatprep.subr.bf16.mxu0 0
  %54 = vmatpush1.bf16.msra.mxu0 0
  %55 = vmatprep.subr.bf16.mxu0 0
  %56 = vmatpush1.bf16.msra.mxu0 0
  %57 = vmatprep.subr.bf16.mxu0 0
  %58 = vmatpush1.bf16.msra.mxu0 0
  %59 = vmatprep.subr.bf16.mxu0 0
  %60 = vmatpush1.bf16.msra.mxu0 %v38
  %61 = vmatprep.subr.bf16.mxu0 0
  %62 = vmatpush1.bf16.msra.mxu0 %v37
  %63 = vmatprep.subr.bf16.mxu0 0
  %64 = vmatpush1.bf16.msra.mxu0 %v36
  %65 = vmatprep.subr.bf16.mxu0 0
  %66 = vmatpush2.bf16.msra.mxu0 0
  %67 = vmatprep.subr.bf16.mxu0 0
  %68 = vmatpush2.bf16.msra.mxu0 0
  %69 = vmatprep.subr.bf16.mxu0 0
  %70 = vmatpush2.bf16.msra.mxu0 0
  %71 = vmatprep.subr.bf16.mxu0 0
  %72 = vmatpush2.bf16.msra.mxu0 0
  %73 = vmatprep.subr.bf16.mxu0 0
  %74 = vmatpush2.bf16.msra.mxu0 0
  %75 = vmatprep.subr.bf16.mxu0 0
  %76 = vmatpush2.bf16.msra.mxu0 0
  %77 = vmatprep.subr.bf16.mxu0 0
  %78 = vmatpush2.bf16.msra.mxu0 0
  %79 = vmatprep.subr.bf16.mxu0 0
  %80 = vmatpush2.bf16.msra.mxu0 0
  %81 = vmatprep.mubr.bf16.mxu0 0
  %82 = vmatmul.mubr.bf16.gmra.mxu0 %v44
  %v83 = vpop.f32.mrf.mxu0
  %v84 = vadd.f32 0.0, %v83
  %v85 = vpop.f32.mrf.mxu0
  %v86 = vpop.f32.mrf.mxu0
  %v87 = vadd.f32 0.0, %v86
  %v88 = vpop.f32.mrf.mxu0
  %89 = vmatprep.mubr.bf16.mxu0 0
  %90 = vmatmul.mubr.bf16.gmra.mxu0 %v47
  %v91 = vpop.f32.mrf.mxu0
  %v92 = vadd.f32 0.0, %v91
  %v93 = vpop.f32.mrf.mxu0
  %v94 = vpop.f32.mrf.mxu0
  %v95 = vadd.f32 0.0, %v94
  %v96 = vpop.f32.mrf.mxu0
  %97 = vdwg.mxu0
  %vm98 = vcmask 261120
  %99 = vst.msk [vmem:[%s2] sm:$0xff] %vm98, %v84
  %100 = vst.msk [vmem:[%s2 + $0x8] sm:$0xff] %vm98, %v87
  %101 = vst.msk [vmem:[%s2 + $0x10] sm:$0xff] %vm98, %v92
  %102 = vst.msk [vmem:[%s2 + $0x18] sm:$0xff] %vm98, %v95
  // Predicated region
  $region10: #{visual_encoder_forward.14} parent=0 // pred_check
    _
  $region11: #{visual_encoder_forward.14} parent=0 // pred_check_branch
    %104 = sbr.rel (0) target = $region13
  $region12: #{visual_encoder_forward.14} parent=0 // pred_region
    _
  $region13: #{visual_encoder_forward.14} parent=0 // pred_fallthru
    _
  // Predicated region
  $region14: #{visual_encoder_forward.14} parent=0 // pred_check
    _
  $region15: #{visual_encoder_forward.14} parent=0 // pred_check_branch
    %106 = sbr.rel (0) target = $region17
  $region16: #{visual_encoder_forward.14} parent=0 // pred_region
    _
  $region17: #{visual_encoder_forward.14} parent=0 // pred_fallthru
    _

// kernel: visual_encoder_forward.15
$region0: #{visual_encoder_forward.15}
  #allocation0 [shape = 'u32[]', space=smem, size = 0x4, offset = 0x4, fixed_abs, tag = 'smem constant byte address 0x4 - core index']
  #allocation1 [shape = 'u32[144,128]{1,0:T(1,128)}', space=vmem, size = 0x12000, scoped, tag = 'internal scratch']
  %s0 = inlined_call_operand.vmem [shape: f32[34,32], index: 0, kind: input, shape index: {}]
  %s1 = inlined_call_operand.vmem [shape: f32[1,32], index: 1, kind: input, shape index: {}]
  %s2 = inlined_call_operand.vmem [shape: f32[1,32], index: 2, kind: input, shape index: {}]
  %s3 = inlined_call_operand.vmem [shape: f32[34,32], index: 3, kind: output, shape index: {}]
  %s4 = sld [smem:[#allocation0]]
  $region22: #{visual_encoder_forward.15} parent=0
    _
  %s6 = ssub.s32 1, %s4
  %s7 = scalar_select 0, %s6, %s4
  // Predicated region
  $region2: #{visual_encoder_forward.15} parent=0 // pred_check
    _
  $region3: #{visual_encoder_forward.15} parent=0 // pred_check_branch
    %9 = sbr.rel (0) target = $region5
  $region4: #{visual_encoder_forward.15} parent=0 // pred_region
    _
  $region5: #{visual_encoder_forward.15} parent=0 // pred_fallthru
    _
  // Predicated region
  $region6: #{visual_encoder_forward.15} parent=0 // pred_check
    _
  $region7: #{visual_encoder_forward.15} parent=0 // pred_check_branch
    %11 = sbr.rel (0) target = $region9
  $region8: #{visual_encoder_forward.15} parent=0 // pred_region
    _
  $region9: #{visual_encoder_forward.15} parent=0 // pred_fallthru
    _
  // Predicated region
  $region10: #{visual_encoder_forward.15} parent=0 // pred_check
    _
  $region11: #{visual_encoder_forward.15} parent=0 // pred_check_branch
    %13 = sbr.rel (0) target = $region13
  $region12: #{visual_encoder_forward.15} parent=0 // pred_region
    _
  $region13: #{visual_encoder_forward.15} parent=0 // pred_fallthru
    _
  %v14 = vld [vmem:[%s0] sm:$0xff]
  %v15 = vld [vmem:[%s0 + $0x8] sm:$0xff]
  %v16 = vld [vmem:[%s0 + $0x10] sm:$0xff]
  %v17 = vld [vmem:[%s0 + $0x18] sm:$0xff]
  %v18 = vld [vmem:[%s0 + $0x20] sm:$0x3]
  %vm19 = vcmask 261120
  %v20 = vsel %vm19, %v14, 0.0
  %21 = vadd.xlane.f32.xlu0 %v20
  %v22 = vpop.xlane.xlu0 %21
  %v23 = vsel %vm19, %v15, 0.0
  %24 = vadd.xlane.f32.xlu0 %v23
  %v25 = vpop.xlane.xlu0 %24
  %v26 = vsel %vm19, %v16, 0.0
  %27 = vadd.xlane.f32.xlu0 %v26
  %v28 = vpop.xlane.xlu0 %27
  %v29 = vsel %vm19, %v17, 0.0
  %30 = vadd.xlane.f32.xlu0 %v29
  %v31 = vpop.xlane.xlu0 %30
  %vm32 = vcmask 254976
  %v33 = vsel %vm32, %v18, 0.0
  %34 = vadd.xlane.f32.xlu0 %v33
  %v35 = vpop.xlane.xlu0 %34
  %v36 = vrcp.pop 32.0
  %v37 = vmul.f32 %v22, %v36
  %v38 = vmul.f32 %v25, %v36
  %v39 = vmul.f32 %v28, %v36
  %v40 = vmul.f32 %v31, %v36
  %v41 = vmul.f32 %v35, %v36
  %v42 = vsub.f32 %v14, %v37
  %v43 = vsub.f32 %v15, %v38
  %v44 = vsub.f32 %v16, %v39
  %v45 = vsub.f32 %v17, %v40
  %v46 = vsub.f32 %v18, %v41
  %v47 = vmul.f32 %v42, %v42
  %v48 = vmul.f32 %v43, %v43
  %v49 = vmul.f32 %v44, %v44
  %v50 = vmul.f32 %v45, %v45
  %v51 = vmul.f32 %v46, %v46
  %v52 = vsel %vm19, %v47, 0.0
  %53 = vadd.xlane.f32.xlu0 %v52
  %v54 = vpop.xlane.xlu0 %53
  %v55 = vsel %vm19, %v48, 0.0
  %56 = vadd.xlane.f32.xlu0 %v55
  %v57 = vpop.xlane.xlu0 %56
  %v58 = vsel %vm19, %v49, 0.0
  %59 = vadd.xlane.f32.xlu0 %v58
  %v60 = vpop.xlane.xlu0 %59
  %v61 = vsel %vm19, %v50, 0.0
  %62 = vadd.xlane.f32.xlu0 %v61
  %v63 = vpop.xlane.xlu0 %62
  %v64 = vsel %vm32, %v51, 0.0
  %65 = vadd.xlane.f32.xlu0 %v64
  %v66 = vpop.xlane.xlu0 %65
  %v67 = vmul.f32 %v54, %v36
  %v68 = vmul.f32 %v57, %v36
  %v69 = vmul.f32 %v60, %v36
  %v70 = vmul.f32 %v63, %v36
  %v71 = vmul.f32 %v66, %v36
  %v72 = vadd.f32 %v67, 1e-05
  %v73 = vadd.f32 %v68, 1e-05
  %v74 = vadd.f32 %v69, 1e-05
  %v75 = vadd.f32 %v70, 1e-05
  %v76 = vadd.f32 %v71, 1e-05
  %v77 = vrsqrt.pop %v72
  %v78 = vrsqrt.pop %v73
  %v79 = vrsqrt.pop %v74
  %v80 = vrsqrt.pop %v75
  %v81 = vrsqrt.pop %v76
  %v82 = vmul.f32 %v42, %v77
  %v83 = vmul.f32 %v43, %v78
  %v84 = vmul.f32 %v44, %v79
  %v85 = vmul.f32 %v45, %v80
  %v86 = vmul.f32 %v46, %v81
  %v87 = vld [vmem:[%s1] sm:$0x1]
  %v89 = vlaneseq
  %v90 = vshrl.u32 %v89, 7
  %v91 = vsub.s32 0, %v90
  %v92 = vrot.slane %v87, %v91
  %v94 = vmul.f32 %v82, %v92
  %v95 = vmul.f32 %v83, %v92
  %v96 = vmul.f32 %v84, %v92
  %v97 = vmul.f32 %v85, %v92
  %v98 = vmul.f32 %v86, %v92
  %v99 = vld [vmem:[%s2] sm:$0x1]
  %v101 = vlaneseq
  %v102 = vshrl.u32 %v101, 7
  %v103 = vsub.s32 0, %v102
  %v104 = vrot.slane %v99, %v103
  %v106 = vadd.f32 %v94, %v104
  %v107 = vadd.f32 %v95, %v104
  %v108 = vadd.f32 %v96, %v104
  %v109 = vadd.f32 %v97, %v104
  %v110 = vadd.f32 %v98, %v104
  %111 = vst.msk [vmem:[%s3] sm:$0xff] %vm19, %v106
  %112 = vst.msk [vmem:[%s3 + $0x8] sm:$0xff] %vm19, %v107
  %113 = vst.msk [vmem:[%s3 + $0x10] sm:$0xff] %vm19, %v108
  %114 = vst.msk [vmem:[%s3 + $0x18] sm:$0xff] %vm19, %v109
  %115 = vst.msk [vmem:[%s3 + $0x20] sm:$0x3] %vm32, %v110
  // Predicated region
  $region14: #{visual_encoder_forward.15} parent=0 // pred_check
    _
  $region15: #{visual_encoder_forward.15} parent=0 // pred_check_branch
    %117 = sbr.rel (0) target = $region17
  $region16: #{visual_encoder_forward.15} parent=0 // pred_region
    _
  $region17: #{visual_encoder_forward.15} parent=0 // pred_fallthru
    _
  // Predicated region
  $region18: #{visual_encoder_forward.15} parent=0 // pred_check
    _
  $region19: #{visual_encoder_forward.15} parent=0 // pred_check_branch
    %119 = sbr.rel (0) target = $region21
  $region20: #{visual_encoder_forward.15} parent=0 // pred_region
    _
  $region21: #{visual_encoder_forward.15} parent=0 // pred_fallthru
    _

// kernel: visual_encoder_forward.16
$region0: #{visual_encoder_forward.16}
  #allocation0 [shape = 'u32[]', space=smem, size = 0x4, offset = 0x4, fixed_abs, tag = 'smem constant byte address 0x4 - core index']
  #allocation1 [shape = 'u32[144,128]{1,0:T(1,128)}', space=vmem, size = 0x12000, scoped, tag = 'internal scratch']
  %s0 = inlined_call_operand.vmem [shape: f32[34,32], index: 0, kind: input, shape index: {}]
  %s1 = inlined_call_operand.vmem [shape: bf16[32,96], index: 1, kind: input, shape index: {}]
  %s2 = inlined_call_operand.vmem [shape: f32[1,96], index: 2, kind: input, shape index: {}]
  %s3 = inlined_call_operand.vmem [shape: f32[1,32], index: 3, kind: input, shape index: {}]
  %s4 = inlined_call_operand.vmem [shape: f32[1,32], index: 4, kind: input, shape index: {}]
  %s5 = inlined_call_operand.vmem [shape: f32[34,96], index: 5, kind: output, shape index: {}]
  %s6 = sld [smem:[#allocation0]]
  $region30: #{visual_encoder_forward.16} parent=0
    _
  %s8 = ssub.s32 1, %s6
  %s9 = scalar_select 0, %s8, %s6
  // Predicated region
  $region2: #{visual_encoder_forward.16} parent=0 // pred_check
    _
  $region3: #{visual_encoder_forward.16} parent=0 // pred_check_branch
    %11 = sbr.rel (0) target = $region5
  $region4: #{visual_encoder_forward.16} parent=0 // pred_region
    _
  $region5: #{visual_encoder_forward.16} parent=0 // pred_fallthru
    _
  // Predicated region
  $region6: #{visual_encoder_forward.16} parent=0 // pred_check
    _
  $region7: #{visual_encoder_forward.16} parent=0 // pred_check_branch
    %13 = sbr.rel (0) target = $region9
  $region8: #{visual_encoder_forward.16} parent=0 // pred_region
    _
  $region9: #{visual_encoder_forward.16} parent=0 // pred_fallthru
    _
  // Predicated region
  $region10: #{visual_encoder_forward.16} parent=0 // pred_check
    _
  $region11: #{visual_encoder_forward.16} parent=0 // pred_check_branch
    %15 = sbr.rel (0) target = $region13
  $region12: #{visual_encoder_forward.16} parent=0 // pred_region
    _
  $region13: #{visual_encoder_forward.16} parent=0 // pred_fallthru
    _
  // Predicated region
  $region14: #{visual_encoder_forward.16} parent=0 // pred_check
    _
  $region15: #{visual_encoder_forward.16} parent=0 // pred_check_branch
    %17 = sbr.rel (0) target = $region17
  $region16: #{visual_encoder_forward.16} parent=0 // pred_region
    _
  $region17: #{visual_encoder_forward.16} parent=0 // pred_fallthru
    _
  // Predicated region
  $region18: #{visual_encoder_forward.16} parent=0 // pred_check
    _
  $region19: #{visual_encoder_forward.16} parent=0 // pred_check_branch
    %19 = sbr.rel (0) target = $region21
  $region20: #{visual_encoder_forward.16} parent=0 // pred_region
    _
  $region21: #{visual_encoder_forward.16} parent=0 // pred_fallthru
    _
  %v21 = vld [vmem:[%s0] sm:$0xff]
  %v22 = vld [vmem:[%s0 + $0x8] sm:$0xff]
  %v23 = vld [vmem:[%s0 + $0x10] sm:$0xff]
  %v24 = vld [vmem:[%s0 + $0x18] sm:$0xff]
  %v25 = vld [vmem:[%s0 + $0x20] sm:$0x3]
  %vm26 = vcmask 261120
  %v27 = vsel %vm26, %v21, 0.0
  %28 = vadd.xlane.f32.xlu0 %v27
  %v29 = vpop.xlane.xlu0 %28
  %v30 = vsel %vm26, %v22, 0.0
  %31 = vadd.xlane.f32.xlu0 %v30
  %v32 = vpop.xlane.xlu0 %31
  %v33 = vsel %vm26, %v23, 0.0
  %34 = vadd.xlane.f32.xlu0 %v33
  %v35 = vpop.xlane.xlu0 %34
  %v36 = vsel %vm26, %v24, 0.0
  %37 = vadd.xlane.f32.xlu0 %v36
  %v38 = vpop.xlane.xlu0 %37
  %vm39 = vcmask 254976
  %v40 = vsel %vm39, %v25, 0.0
  %41 = vadd.xlane.f32.xlu0 %v40
  %v42 = vpop.xlane.xlu0 %41
  %v43 = vrcp.pop 32.0
  %v44 = vmul.f32 %v29, %v43
  %v45 = vmul.f32 %v32, %v43
  %v46 = vmul.f32 %v35, %v43
  %v47 = vmul.f32 %v38, %v43
  %v48 = vmul.f32 %v42, %v43
  %v49 = vsub.f32 %v21, %v44
  %v50 = vsub.f32 %v22, %v45
  %v51 = vsub.f32 %v23, %v46
  %v52 = vsub.f32 %v24, %v47
  %v53 = vsub.f32 %v25, %v48
  %v54 = vmul.f32 %v49, %v49
  %v55 = vmul.f32 %v50, %v50
  %v56 = vmul.f32 %v51, %v51
  %v57 = vmul.f32 %v52, %v52
  %v58 = vmul.f32 %v53, %v53
  %v59 = vsel %vm26, %v54, 0.0
  %60 = vadd.xlane.f32.xlu0 %v59
  %v61 = vpop.xlane.xlu0 %60
  %v62 = vsel %vm26, %v55, 0.0
  %63 = vadd.xlane.f32.xlu0 %v62
  %v64 = vpop.xlane.xlu0 %63
  %v65 = vsel %vm26, %v56, 0.0
  %66 = vadd.xlane.f32.xlu0 %v65
  %v67 = vpop.xlane.xlu0 %66
  %v68 = vsel %vm26, %v57, 0.0
  %69 = vadd.xlane.f32.xlu0 %v68
  %v70 = vpop.xlane.xlu0 %69
  %v71 = vsel %vm39, %v58, 0.0
  %72 = vadd.xlane.f32.xlu0 %v71
  %v73 = vpop.xlane.xlu0 %72
  %v74 = vmul.f32 %v61, %v43
  %v75 = vmul.f32 %v64, %v43
  %v76 = vmul.f32 %v67, %v43
  %v77 = vmul.f32 %v70, %v43
  %v78 = vmul.f32 %v73, %v43
  %v79 = vadd.f32 %v74, 1e-05
  %v80 = vadd.f32 %v75, 1e-05
  %v81 = vadd.f32 %v76, 1e-05
  %v82 = vadd.f32 %v77, 1e-05
  %v83 = vadd.f32 %v78, 1e-05
  %v84 = vrsqrt.pop %v79
  %v85 = vrsqrt.pop %v80
  %v86 = vrsqrt.pop %v81
  %v87 = vrsqrt.pop %v82
  %v88 = vrsqrt.pop %v83
  %v89 = vmul.f32 %v49, %v84
  %v90 = vmul.f32 %v50, %v85
  %v91 = vmul.f32 %v51, %v86
  %v92 = vmul.f32 %v52, %v87
  %v93 = vmul.f32 %v53, %v88
  %v94 = vld [vmem:[%s3] sm:$0x1]
  %v96 = vlaneseq
  %v97 = vshrl.u32 %v96, 7
  %v98 = vsub.s32 0, %v97
  %v99 = vrot.slane %v94, %v98
  %v101 = vmul.f32 %v89, %v99
  %v102 = vmul.f32 %v90, %v99
  %v103 = vmul.f32 %v91, %v99
  %v104 = vmul.f32 %v92, %v99
  %v105 = vmul.f32 %v93, %v99
  %v106 = vld [vmem:[%s4] sm:$0x1]
  %v108 = vlaneseq
  %v109 = vshrl.u32 %v108, 7
  %v110 = vsub.s32 0, %v109
  %v111 = vrot.slane %v106, %v110
  %v113 = vadd.f32 %v101, %v111
  %v114 = vadd.f32 %v102, %v111
  %v115 = vadd.f32 %v103, %v111
  %v116 = vadd.f32 %v104, %v111
  %v117 = vadd.f32 %v105, %v111
  %v118 = vpack.c.bf16 %v114, %v113
  %v119 = vpack.c.bf16 %v116, %v115
  %v120 = vpack.c.bf16 %v117, %v117
  %v121 = vld [vmem:[%s1] sm:$0xf]
  %v122 = vld [vmem:[%s1 + $0x4] sm:$0xf]
  %v123 = vld [vmem:[%s1 + $0x8] sm:$0xf]
  %v124 = vld [vmem:[%s1 + $0xc] sm:$0xf]
  %v125 = vld [vmem:[%s2] sm:$0x1]
  %v127 = vlaneseq
  %v128 = vshrl.u32 %v127, 7
  %v129 = vsub.s32 0, %v128
  %v130 = vrot.slane %v125, %v129
  %v136 = vunpack.c.l.b16 %v121
  %v137 = vunpack.c.l.b16 %v122
  %v138 = vunpack.c.l.b16 %v123
  %v139 = vunpack.c.l.b16 %v124
  %v140 = vpack.c.b16 %v137, %v136
  %v141 = vpack.c.b16 %v139, %v138
  %v145 = vsel %vm26, %v118, 0
  %v148 = vsel %vm26, %v119, 0
  %v151 = vsel %vm26, %v120, 0
  %153 = vmatprep.subr.bf16.mxu0 0
  %154 = vmatpush1.bf16.msra.mxu0 0
  %155 = vmatprep.subr.bf16.mxu0 0
  %156 = vmatpush1.bf16.msra.mxu0 0
  %157 = vmatprep.subr.bf16.mxu0 0
  %158 = vmatpush1.bf16.msra.mxu0 0
  %159 = vmatprep.subr.bf16.mxu0 0
  %160 = vmatpush1.bf16.msra.mxu0 0
  %161 = vmatprep.subr.bf16.mxu0 0
  %162 = vmatpush1.bf16.msra.mxu0 0
  %163 = vmatprep.subr.bf16.mxu0 0
  %164 = vmatpush1.bf16.msra.mxu0 0
  %165 = vmatprep.subr.bf16.mxu0 0
  %166 = vmatpush1.bf16.msra.mxu0 %v141
  %167 = vmatprep.subr.bf16.mxu0 0
  %168 = vmatpush1.bf16.msra.mxu0 %v140
  %169 = vmatprep.subr.bf16.mxu0 0
  %170 = vmatpush2.bf16.msra.mxu0 0
  %171 = vmatprep.subr.bf16.mxu0 0
  %172 = vmatpush2.bf16.msra.mxu0 0
  %173 = vmatprep.subr.bf16.mxu0 0
  %174 = vmatpush2.bf16.msra.mxu0 0
  %175 = vmatprep.subr.bf16.mxu0 0
  %176 = vmatpush2.bf16.msra.mxu0 0
  %177 = vmatprep.subr.bf16.mxu0 0
  %178 = vmatpush2.bf16.msra.mxu0 0
  %179 = vmatprep.subr.bf16.mxu0 0
  %180 = vmatpush2.bf16.msra.mxu0 0
  %181 = vmatprep.subr.bf16.mxu0 0
  %182 = vmatpush2.bf16.msra.mxu0 0
  %183 = vmatprep.subr.bf16.mxu0 0
  %184 = vmatpush2.bf16.msra.mxu0 0
  %185 = vmatprep.mubr.bf16.mxu0 0
  %186 = vmatmul.mubr.bf16.gmra.mxu0 %v145
  %v187 = vpop.f32.mrf.mxu0
  %v188 = vadd.f32 %v130, %v187
  %v189 = vpop.f32.mrf.mxu0
  %v190 = vpop.f32.mrf.mxu0
  %v191 = vadd.f32 %v130, %v190
  %v192 = vpop.f32.mrf.mxu0
  %193 = vmatprep.mubr.bf16.mxu0 0
  %194 = vmatmul.mubr.bf16.gmra.mxu0 %v148
  %v195 = vpop.f32.mrf.mxu0
  %v196 = vadd.f32 %v130, %v195
  %v197 = vpop.f32.mrf.mxu0
  %v198 = vpop.f32.mrf.mxu0
  %v199 = vadd.f32 %v130, %v198
  %v200 = vpop.f32.mrf.mxu0
  %201 = vmatprep.mubr.bf16.mxu0 0
  %202 = vmatmul.mubr.bf16.gmra.mxu0 %v151
  %v203 = vpop.f32.mrf.mxu0
  %v204 = vadd.f32 %v130, %v203
  %v205 = vpop.f32.mrf.mxu0
  %v206 = vpop.f32.mrf.mxu0
  %v207 = vpop.f32.mrf.mxu0
  %208 = vdwg.mxu0
  %vm209 = vcmask 785408
  %210 = vst.msk [vmem:[%s5] sm:$0xff] %vm209, %v188
  %211 = vst.msk [vmem:[%s5 + $0x8] sm:$0xff] %vm209, %v191
  %212 = vst.msk [vmem:[%s5 + $0x10] sm:$0xff] %vm209, %v196
  %213 = vst.msk [vmem:[%s5 + $0x18] sm:$0xff] %vm209, %v199
  %vm214 = vcmask 779264
  %215 = vst.msk [vmem:[%s5 + $0x20] sm:$0x3] %vm214, %v204
  // Predicated region
  $region22: #{visual_encoder_forward.16} parent=0 // pred_check
    _
  $region23: #{visual_encoder_forward.16} parent=0 // pred_check_branch
    %217 = sbr.rel (0) target = $region25
  $region24: #{visual_encoder_forward.16} parent=0 // pred_region
    _
  $region25: #{visual_encoder_forward.16} parent=0 // pred_fallthru
    _
  // Predicated region
  $region26: #{visual_encoder_forward.16} parent=0 // pred_check
    _
  $region27: #{visual_encoder_forward.16} parent=0 // pred_check_branch
    %219 = sbr.rel (0) target = $region29
  $region28: #{visual_encoder_forward.16} parent=0 // pred_region
    _
  $region29: #{visual_encoder_forward.16} parent=0 // pred_fallthru
    _

// kernel: visual_encoder_forward.17
$region0: #{visual_encoder_forward.17}
  #allocation0 [shape = 'u32[]', space=smem, size = 0x4, offset = 0x4, fixed_abs, tag = 'smem constant byte address 0x4 - core index']
  #allocation1 [shape = 'u32[144,128]{1,0:T(1,128)}', space=vmem, size = 0x12000, scoped, tag = 'internal scratch']
  %s0 = inlined_call_operand.vmem [shape: f32[2,17,96], index: 0, kind: input, shape index: {}]
  %s1 = inlined_call_operand.vmem [shape: f32[2,17,32], index: 1, kind: output, shape index: {}]
  %s2 = sld [smem:[#allocation0]]
  $region37: #{visual_encoder_forward.17} parent=0
    _
  %s4 = ssub.s32 1, %s2
  %s5 = scalar_select 0, %s4, %s2
  loop: start=0, step=1, limit=4
  $region2: #{visual_encoder_forward.17} parent=0 // loop_pre_header
    _
  $region3: #{visual_encoder_forward.17} parent=0 // loop_header
    %s7 = sphi 0, %s11
    %p8 = scmp.ge.s32.totalorder %s7, 4
    %s17 = sphi 0, %s19
    %s20 = sphi 0, %s17
    %s21 = sphi 0, %s20
    %s37 = sphi 0, %s21
    %s43 = sphi 0, %s45
    %s46 = sphi 0, %s43
    %s47 = sphi 0, %s46
    %s63 = sphi 0, %s47
  $region4: #{visual_encoder_forward.17} parent=0 // loop_header_branch
    %10 = sbr.rel (%p8) target = $region8
  $region5: #{visual_encoder_forward.17} parent=0 // loop_body
    %s12 = ssub.s32 %s7, 1
    %s13 = ssub.s32 %s7, 2
    %s14 = sadd.s32 %s7, 1
    %s15 = ssub.s32 %s7, %s14
    %p16 = scmp.eq.s32.totalorder %s15, 0
    %s18 = sadd.s32 %s17, 1
    %s19 = scalar_select %p16, %s17, %s18
    %p22 = pneg %p16
    %p23 = scmp.eq.s32.totalorder %s7, 1
    %p24 = por %p22, %p23
    %p25 = scmp.ne.s32.totalorder %s17, %s20
    %p26 = scmp.eq.s32.totalorder %s7, 0
    %p27 = por %p25, %p26
    %p28 = scmp.ne.s32.totalorder %s17, %s20
    %p29 = scmp.eq.s32.totalorder %s12, 1
    %p30 = por %p28, %p29
    %p31 = scmp.ne.s32.totalorder %s20, %s21
    %p32 = scmp.eq.s32.totalorder %s12, 0
    %p33 = por %p31, %p32
    %p34 = scmp.ne.s32.totalorder %s20, %s21
    %p35 = scmp.eq.s32.totalorder %s13, 1
    %p36 = por %p34, %p35
    %p38 = scmp.ne.s32.totalorder %s21, %s37
    %p39 = scmp.eq.s32.totalorder %s13, 0
    %p40 = por %p38, %p39
    %s41 = ssub.s32 %s7, %s14
    %p42 = scmp.eq.s32.totalorder %s41, 0
    %s44 = sadd.s32 %s43, 1
    %s45 = scalar_select %p42, %s43, %s44
    %p48 = pneg %p42
    %p49 = scmp.eq.s32.totalorder %s7, 1
    %p50 = por %p48, %p49
    %p51 = scmp.ne.s32.totalorder %s43, %s46
    %p52 = scmp.eq.s32.totalorder %s7, 0
    %p53 = por %p51, %p52
    %p54 = scmp.ne.s32.totalorder %s43, %s46
    %p55 = scmp.eq.s32.totalorder %s12, 1
    %p56 = por %p54, %p55
    %p57 = scmp.ne.s32.totalorder %s46, %s47
    %p58 = scmp.eq.s32.totalorder %s12, 0
    %p59 = por %p57, %p58
    %p60 = scmp.ne.s32.totalorder %s46, %s47
    %p61 = scmp.eq.s32.totalorder %s13, 1
    %p62 = por %p60, %p61
    %p64 = scmp.ne.s32.totalorder %s47, %s63
    %p65 = scmp.eq.s32.totalorder %s13, 0
    %p66 = por %p64, %p65
    %p67 = scmp.le.s32.totalorder 1, %s7
    %p68 = scmp.lt.s32.totalorder %s7, 3
    %p69 = pnand %p67, %p68
    %p70 = pneg %p69
    // Predicated region
    $region9: #{visual_encoder_forward.17} parent=5 // pred_check
      _
    $region10: #{visual_encoder_forward.17} parent=5 // pred_check_branch
      %72 = sbr.rel (%p69) target = $region12
    $region11: #{visual_encoder_forward.17} parent=5 // pred_region
      %s73 = ssub.s32 %s7, 1
    $region12: #{visual_encoder_forward.17} parent=5 // pred_fallthru
      _
    %p74 = scmp.lt.s32.totalorder %s7, 2
    // Predicated region
    $region13: #{visual_encoder_forward.17} parent=5 // pred_check
      %p75 = pneg %p74
    $region14: #{visual_encoder_forward.17} parent=5 // pred_check_branch
      %77 = sbr.rel (%p75) target = $region16
    $region15: #{visual_encoder_forward.17} parent=5 // pred_region
      // Predicated region
      $region17: #{visual_encoder_forward.17} parent=15 // pred_check
        %p78 = pneg %p27
      $region18: #{visual_encoder_forward.17} parent=15 // pred_check_branch
        %80 = sbr.rel (%p78) target = $region20
      $region19: #{visual_encoder_forward.17} parent=15 // pred_region
        %p81 = scmp.lt.s32.totalorder %s7, 1
        %s82 = scalar_select %p81, %s7, 1
        %s83 = smul.addr %s82, 3
        %s84 = smul.addr %s83, 8
        %s85 = scalar_lea.vmem %s0, %s84
      $region20: #{visual_encoder_forward.17} parent=15 // pred_fallthru
        _
    $region16: #{visual_encoder_forward.17} parent=5 // pred_fallthru
      _
    %p86 = scmp.le.s32.totalorder 1, %s7
    %p87 = scmp.lt.s32.totalorder %s7, 3
    %p88 = pnand %p86, %p87
    %p89 = pneg %p88
    // Predicated region
    $region21: #{visual_encoder_forward.17} parent=5 // pred_check
      _
    $region22: #{visual_encoder_forward.17} parent=5 // pred_check_branch
      %91 = sbr.rel (%p88) target = $region24
    $region23: #{visual_encoder_forward.17} parent=5 // pred_region
      %s92 = ssub.s32 %s7, 1
      %p93 = scmp.lt.s32.totalorder %s12, 1
      %s94 = scalar_select %p93, %s12, 1
      %s95 = smul.addr %s94, 3
      %s96 = smul.addr %s95, 8
      %s97 = scalar_lea.vmem %s0, %s96
      %p98 = pneg %p33
      %p99 = pneg %p30
      %p100 = pneg %p59
      %p101 = pneg %p56
      %p102 = scmp.lt.s32.totalorder %s12, 1
      %s103 = scalar_select %p102, %s12, 1
      %s104 = smul.addr %s103, 3
      %s105 = smul.addr %s104, 8
      %s106 = scalar_lea.vmem %s1, %s105
      %p107 = scmp.lt.s32.totalorder %s12, 1
      %s108 = scalar_select %p107, %s12, 1
      %s109 = smul.addr %s108, 3
      %s110 = smul.addr %s109, 8
      %s111 = scalar_lea.vmem %s0, %s110
      %p112 = scmp.lt.s32.totalorder %s12, 1
      %s113 = scalar_select %p112, %s12, 1
      %s114 = smul.addr %s113, 3
      %s115 = smul.addr %s114, 8
      %s116 = scalar_lea.vmem %s1, %s115
      %v118 = vld [vmem:[%s111] sm:$0xff]
      %v119 = vld [vmem:[%s111 + $0x8] sm:$0xff]
      %v120 = vld [vmem:[%s111 + $0x10] sm:$0x1]
      %v121 = vpack.c.bf16 %v119, %v118
      %v122 = vpack.c.bf16 %v120, %v120
      %125 = vrot.lane.b32.xlu0 %v121, 96
      %v126 = vpop.permute.xlu0 %125
      %127 = vrot.lane.b32.xlu0 %v122, 96
      %v128 = vpop.permute.xlu0 %127
      %vm129 = vcmask 64512
      %v131 = vsel %vm129, %v121, 0
      %v134 = vsel %vm129, %v122, 0
      %v137 = vsel %vm129, %v126, 0
      %v140 = vsel %vm129, %v128, 0
      %142 = vmatprep.subr.bf16.mxu0 0
      %143 = vmatpush1.bf16.xpose.msra.mxu0 0
      %144 = vmatprep.subr.bf16.mxu0 0
      %145 = vmatpush1.bf16.xpose.msra.mxu0 0
      %146 = vmatprep.subr.bf16.mxu0 0
      %147 = vmatpush1.bf16.xpose.msra.mxu0 0
      %148 = vmatprep.subr.bf16.mxu0 0
      %149 = vmatpush1.bf16.xpose.msra.mxu0 0
      %150 = vmatprep.subr.bf16.mxu0 0
      %151 = vmatpush1.bf16.xpose.msra.mxu0 0
      %152 = vmatprep.subr.bf16.mxu0 0
      %153 = vmatpush1.bf16.xpose.msra.mxu0 0
      %154 = vmatprep.subr.bf16.mxu0 0
      %155 = vmatpush1.bf16.xpose.msra.mxu0 %v140
      %156 = vmatprep.subr.bf16.mxu0 0
      %157 = vmatpush1.bf16.xpose.msra.mxu0 %v137
      %158 = vmatprep.subr.bf16.mxu0 0
      %159 = vmatpush2.bf16.xpose.msra.mxu0 0
      %160 = vmatprep.subr.bf16.mxu0 0
      %161 = vmatpush2.bf16.xpose.msra.mxu0 0
      %162 = vmatprep.subr.bf16.mxu0 0
      %163 = vmatpush2.bf16.xpose.msra.mxu0 0
      %164 = vmatprep.subr.bf16.mxu0 0
      %165 = vmatpush2.bf16.xpose.msra.mxu0 0
      %166 = vmatprep.subr.bf16.mxu0 0
      %167 = vmatpush2.bf16.xpose.msra.mxu0 0
      %168 = vmatprep.subr.bf16.mxu0 0
      %169 = vmatpush2.bf16.xpose.msra.mxu0 0
      %170 = vmatprep.subr.bf16.mxu0 0
      %171 = vmatpush2.bf16.xpose.msra.mxu0 0
      %172 = vmatprep.subr.bf16.mxu0 0
      %173 = vmatpush2.bf16.xpose.msra.mxu0 0
      %174 = vmatprep.mubr.bf16.mxu0 0
      %175 = vmatmul.mubr.bf16.gmra.mxu0 %v131
      %v176 = vpop.f32.mrf.mxu0
      %v177 = vadd.f32 0.0, %v176
      %v178 = vpop.f32.mrf.mxu0
      %v179 = vpop.f32.mrf.mxu0
      %v180 = vadd.f32 0.0, %v179
      %v181 = vpop.f32.mrf.mxu0
      %182 = vmatprep.mubr.bf16.mxu0 0
      %183 = vmatmul.mubr.bf16.gmra.mxu0 %v134
      %v184 = vpop.f32.mrf.mxu0
      %v185 = vadd.f32 0.0, %v184
      %v186 = vpop.f32.mrf.mxu0
      %v187 = vpop.f32.mrf.mxu0
      %v188 = vpop.f32.mrf.mxu0
      %189 = vdwg.mxu0
      %vm190 = vcmask 138240
      %v191 = vsel %vm190, %v177, -inf
      %192 = vmax.xlane.f32.xlu0 %v191
      %v193 = vpop.xlane.xlu0 %192
      %v194 = vsel %vm190, %v180, -inf
      %195 = vmax.xlane.f32.xlu0 %v194
      %v196 = vpop.xlane.xlu0 %195
      %vm197 = vcmask 131072
      %v198 = vsel %vm197, %v185, -inf
      %199 = vmax.xlane.f32.xlu0 %v198
      %v200 = vpop.xlane.xlu0 %199
      %v201 = vsub.f32 %v177, %v193
      %v202 = vsub.f32 %v180, %v196
      %v203 = vsub.f32 %v185, %v200
      %v204 = vmul.f32 %v201, 1.442695
      %v205 = vpow.pop %v204
      %v206 = vmul.f32 %v202, 1.442695
      %v207 = vpow.pop %v206
      %v208 = vmul.f32 %v203, 1.442695
      %v209 = vpow.pop %v208
      %v210 = vsel %vm190, %v205, 0.0
      %211 = vadd.xlane.f32.xlu0 %v210
      %v212 = vpop.xlane.xlu0 %211
      %v213 = vsel %vm190, %v207, 0.0
      %214 = vadd.xlane.f32.xlu0 %v213
      %v215 = vpop.xlane.xlu0 %214
      %v216 = vsel %vm197, %v209, 0.0
      %217 = vadd.xlane.f32.xlu0 %v216
      %v218 = vpop.xlane.xlu0 %217
      %v219 = vrcp.pop %v212
      %v220 = vrcp.pop %v215
      %v221 = vrcp.pop %v218
      %v222 = vmul.f32 %v205, %v219
      %v223 = vmul.f32 %v207, %v220
      %v224 = vmul.f32 %v209, %v221
      %v225 = vpack.c.bf16 %v223, %v222
      %v226 = vpack.c.bf16 %v224, %v224
      %227 = vrot.lane.b32.xlu0 %v121, 64
      %v228 = vpop.permute.xlu0 %227
      %229 = vrot.lane.b32.xlu0 %v122, 64
      %v230 = vpop.permute.xlu0 %229
      %v233 = vsel %vm190, %v225, 0
      %v236 = vsel %vm190, %v226, 0
      %vm238 = vcmask 1040384
      %v239 = vsel 0, 4294967295, 65535
      %v240 = vsel %vm238, %v239, 0
      %v242 = vand.u32 %v230, %v240
      %244 = vmatprep.subr.bf16.mxu0 0
      %245 = vmatpush1.bf16.msra.mxu0 0
      %246 = vmatprep.subr.bf16.mxu0 0
      %247 = vmatpush1.bf16.msra.mxu0 0
      %248 = vmatprep.subr.bf16.mxu0 0
      %249 = vmatpush1.bf16.msra.mxu0 0
      %250 = vmatprep.subr.bf16.mxu0 0
      %251 = vmatpush1.bf16.msra.mxu0 0
      %252 = vmatprep.subr.bf16.mxu0 0
      %253 = vmatpush1.bf16.msra.mxu0 0
      %254 = vmatprep.subr.bf16.mxu0 0
      %255 = vmatpush1.bf16.msra.mxu0 0
      %256 = vmatprep.subr.bf16.mxu0 0
      %257 = vmatpush1.bf16.msra.mxu0 %v242
      %258 = vmatprep.subr.bf16.mxu0 0
      %259 = vmatpush1.bf16.msra.mxu0 %v228
      %260 = vmatprep.subr.bf16.mxu0 0
      %261 = vmatpush2.bf16.msra.mxu0 0
      %262 = vmatprep.subr.bf16.mxu0 0
      %263 = vmatpush2.bf16.msra.mxu0 0
      %264 = vmatprep.subr.bf16.mxu0 0
      %265 = vmatpush2.bf16.msra.mxu0 0
      %266 = vmatprep.subr.bf16.mxu0 0
      %267 = vmatpush2.bf16.msra.mxu0 0
      %268 = vmatprep.subr.bf16.mxu0 0
      %269 = vmatpush2.bf16.msra.mxu0 0
      %270 = vmatprep.subr.bf16.mxu0 0
      %271 = vmatpush2.bf16.msra.mxu0 0
      %272 = vmatprep.subr.bf16.mxu0 0
      %273 = vmatpush2.bf16.msra.mxu0 0
      %274 = vmatprep.subr.bf16.mxu0 0
      %275 = vmatpush2.bf16.msra.mxu0 0
      %276 = vmatprep.mubr.bf16.mxu0 0
      %277 = vmatmul.mubr.bf16.gmra.mxu0 %v233
      %v278 = vpop.f32.mrf.mxu0
      %v279 = vadd.f32 0.0, %v278
      %v280 = vpop.f32.mrf.mxu0
      %v281 = vpop.f32.mrf.mxu0
      %v282 = vadd.f32 0.0, %v281
      %v283 = vpop.f32.mrf.mxu0
      %284 = vmatprep.mubr.bf16.mxu0 0
      %285 = vmatmul.mubr.bf16.gmra.mxu0 %v236
      %v286 = vpop.f32.mrf.mxu0
      %v287 = vadd.f32 0.0, %v286
      %v288 = vpop.f32.mrf.mxu0
      %v289 = vpop.f32.mrf.mxu0
      %v290 = vpop.f32.mrf.mxu0
      %291 = vdwg.mxu0
      %292 = vrot.lane.b32.xlu0 %v121, 120
      %v293 = vpop.permute.xlu0 %292
      %294 = vrot.lane.b32.xlu0 %v122, 120
      %v295 = vpop.permute.xlu0 %294
      %296 = vrot.lane.b32.xlu0 %v121, 88
      %v297 = vpop.permute.xlu0 %296
      %298 = vrot.lane.b32.xlu0 %v122, 88
      %v299 = vpop.permute.xlu0 %298
      %v301 = vsel %vm129, %v293, 0
      %v304 = vsel %vm129, %v295, 0
      %v307 = vsel %vm129, %v297, 0
      %v310 = vsel %vm129, %v299, 0
      %312 = vmatprep.subr.bf16.mxu0 0
      %313 = vmatpush1.bf16.xpose.msra.mxu0 0
      %314 = vmatprep.subr.bf16.mxu0 0
      %315 = vmatpush1.bf16.xpose.msra.mxu0 0
      %316 = vmatprep.subr.bf16.mxu0 0
      %317 = vmatpush1.bf16.xpose.msra.mxu0 0
      %318 = vmatprep.subr.bf16.mxu0 0
      %319 = vmatpush1.bf16.xpose.msra.mxu0 0
      %320 = vmatprep.subr.bf16.mxu0 0
      %321 = vmatpush1.bf16.xpose.msra.mxu0 0
      %322 = vmatprep.subr.bf16.mxu0 0
      %323 = vmatpush1.bf16.xpose.msra.mxu0 0
      %324 = vmatprep.subr.bf16.mxu0 0
      %325 = vmatpush1.bf16.xpose.msra.mxu0 %v310
      %326 = vmatprep.subr.bf16.mxu0 0
      %327 = vmatpush1.bf16.xpose.msra.mxu0 %v307
      %328 = vmatprep.subr.bf16.mxu0 0
      %329 = vmatpush2.bf16.xpose.msra.mxu0 0
      %330 = vmatprep.subr.bf16.mxu0 0
      %331 = vmatpush2.bf16.xpose.msra.mxu0 0
      %332 = vmatprep.subr.bf16.mxu0 0
      %333 = vmatpush2.bf16.xpose.msra.mxu0 0
      %334 = vmatprep.subr.bf16.mxu0 0
      %335 = vmatpush2.bf16.xpose.msra.mxu0 0
      %336 = vmatprep.subr.bf16.mxu0 0
      %337 = vmatpush2.bf16.xpose.msra.mxu0 0
      %338 = vmatprep.subr.bf16.mxu0 0
      %339 = vmatpush2.bf16.xpose.msra.mxu0 0
      %340 = vmatprep.subr.bf16.mxu0 0
      %341 = vmatpush2.bf16.xpose.msra.mxu0 0
      %342 = vmatprep.subr.bf16.mxu0 0
      %343 = vmatpush2.bf16.xpose.msra.mxu0 0
      %344 = vmatprep.mubr.bf16.mxu0 0
      %345 = vmatmul.mubr.bf16.gmra.mxu0 %v301
      %v346 = vpop.f32.mrf.mxu0
      %v347 = vadd.f32 0.0, %v346
      %v348 = vpop.f32.mrf.mxu0
      %v349 = vpop.f32.mrf.mxu0
      %v350 = vadd.f32 0.0, %v349
      %v351 = vpop.f32.mrf.mxu0
      %352 = vmatprep.mubr.bf16.mxu0 0
      %353 = vmatmul.mubr.bf16.gmra.mxu0 %v304
      %v354 = vpop.f32.mrf.mxu0
      %v355 = vadd.f32 0.0, %v354
      %v356 = vpop.f32.mrf.mxu0
      %v357 = vpop.f32.mrf.mxu0
      %v358 = vpop.f32.mrf.mxu0
      %359 = vdwg.mxu0
      %v360 = vsel %vm190, %v347, -inf
      %361 = vmax.xlane.f32.xlu0 %v360
      %v362 = vpop.xlane.xlu0 %361
      %v363 = vsel %vm190, %v350, -inf
      %364 = vmax.xlane.f32.xlu0 %v363
      %v365 = vpop.xlane.xlu0 %364
      %v366 = vsel %vm197, %v355, -inf
      %367 = vmax.xlane.f32.xlu0 %v366
      %v368 = vpop.xlane.xlu0 %367
      %v369 = vsub.f32 %v347, %v362
      %v370 = vsub.f32 %v350, %v365
      %v371 = vsub.f32 %v355, %v368
      %v372 = vmul.f32 %v369, 1.442695
      %v373 = vpow.pop %v372
      %v374 = vmul.f32 %v370, 1.442695
      %v375 = vpow.pop %v374
      %v376 = vmul.f32 %v371, 1.442695
      %v377 = vpow.pop %v376
      %v378 = vsel %vm190, %v373, 0.0
      %379 = vadd.xlane.f32.xlu0 %v378
      %v380 = vpop.xlane.xlu0 %379
      %v381 = vsel %vm190, %v375, 0.0
      %382 = vadd.xlane.f32.xlu0 %v381
      %v383 = vpop.xlane.xlu0 %382
      %v384 = vsel %vm197, %v377, 0.0
      %385 = vadd.xlane.f32.xlu0 %v384
      %v386 = vpop.xlane.xlu0 %385
      %v387 = vrcp.pop %v380
      %v388 = vrcp.pop %v383
      %v389 = vrcp.pop %v386
      %v390 = vmul.f32 %v373, %v387
      %v391 = vmul.f32 %v375, %v388
      %v392 = vmul.f32 %v377, %v389
      %v393 = vpack.c.bf16 %v391, %v390
      %v394 = vpack.c.bf16 %v392, %v392
      %395 = vrot.lane.b32.xlu0 %v121, 56
      %v396 = vpop.permute.xlu0 %395
      %397 = vrot.lane.b32.xlu0 %v122, 56
      %v398 = vpop.permute.xlu0 %397
      %v401 = vsel %vm190, %v393, 0
      %v404 = vsel %vm190, %v394, 0
      %v407 = vand.u32 %v398, %v240
      %409 = vmatprep.subr.bf16.mxu0 0
      %410 = vmatpush1.bf16.msra.mxu0 0
      %411 = vmatprep.subr.bf16.mxu0 0
      %412 = vmatpush1.bf16.msra.mxu0 0
      %413 = vmatprep.subr.bf16.mxu0 0
      %414 = vmatpush1.bf16.msra.mxu0 0
      %415 = vmatprep.subr.bf16.mxu0 0
      %416 = vmatpush1.bf16.msra.mxu0 0
      %417 = vmatprep.subr.bf16.mxu0 0
      %418 = vmatpush1.bf16.msra.mxu0 0
      %419 = vmatprep.subr.bf16.mxu0 0
      %420 = vmatpush1.bf16.msra.mxu0 0
      %421 = vmatprep.subr.bf16.mxu0 0
      %422 = vmatpush1.bf16.msra.mxu0 %v407
      %423 = vmatprep.subr.bf16.mxu0 0
      %424 = vmatpush1.bf16.msra.mxu0 %v396
      %425 = vmatprep.subr.bf16.mxu0 0
      %426 = vmatpush2.bf16.msra.mxu0 0
      %427 = vmatprep.subr.bf16.mxu0 0
      %428 = vmatpush2.bf16.msra.mxu0 0
      %429 = vmatprep.subr.bf16.mxu0 0
      %430 = vmatpush2.bf16.msra.mxu0 0
      %431 = vmatprep.subr.bf16.mxu0 0
      %432 = vmatpush2.bf16.msra.mxu0 0
      %433 = vmatprep.subr.bf16.mxu0 0
      %434 = vmatpush2.bf16.msra.mxu0 0
      %435 = vmatprep.subr.bf16.mxu0 0
      %436 = vmatpush2.bf16.msra.mxu0 0
      %437 = vmatprep.subr.bf16.mxu0 0
      %438 = vmatpush2.bf16.msra.mxu0 0
      %439 = vmatprep.subr.bf16.mxu0 0
      %440 = vmatpush2.bf16.msra.mxu0 0
      %441 = vmatprep.mubr.bf16.mxu0 0
      %442 = vmatmul.mubr.bf16.gmra.mxu0 %v401
      %v443 = vpop.f32.mrf.mxu0
      %v444 = vadd.f32 0.0, %v443
      %v445 = vpop.f32.mrf.mxu0
      %v446 = vpop.f32.mrf.mxu0
      %v447 = vadd.f32 0.0, %v446
      %v448 = vpop.f32.mrf.mxu0
      %449 = vmatprep.mubr.bf16.mxu0 0
      %450 = vmatmul.mubr.bf16.gmra.mxu0 %v404
      %v451 = vpop.f32.mrf.mxu0
      %v452 = vadd.f32 0.0, %v451
      %v453 = vpop.f32.mrf.mxu0
      %v454 = vpop.f32.mrf.mxu0
      %v455 = vpop.f32.mrf.mxu0
      %456 = vdwg.mxu0
      %457 = vrot.lane.b32.xlu0 %v121, 112
      %v458 = vpop.permute.xlu0 %457
      %459 = vrot.lane.b32.xlu0 %v122, 112
      %v460 = vpop.permute.xlu0 %459
      %461 = vrot.lane.b32.xlu0 %v121, 80
      %v462 = vpop.permute.xlu0 %461
      %463 = vrot.lane.b32.xlu0 %v122, 80
      %v464 = vpop.permute.xlu0 %463
      %v466 = vsel %vm129, %v458, 0
      %v469 = vsel %vm129, %v460, 0
      %v472 = vsel %vm129, %v462, 0
      %v475 = vsel %vm129, %v464, 0
      %477 = vmatprep.subr.bf16.mxu0 0
      %478 = vmatpush1.bf16.xpose.msra.mxu0 0
      %479 = vmatprep.subr.bf16.mxu0 0
      %480 = vmatpush1.bf16.xpose.msra.mxu0 0
      %481 = vmatprep.subr.bf16.mxu0 0
      %482 = vmatpush1.bf16.xpose.msra.mxu0 0
      %483 = vmatprep.subr.bf16.mxu0 0
      %484 = vmatpush1.bf16.xpose.msra.mxu0 0
      %485 = vmatprep.subr.bf16.mxu0 0
      %486 = vmatpush1.bf16.xpose.msra.mxu0 0
      %487 = vmatprep.subr.bf16.mxu0 0
      %488 = vmatpush1.bf16.xpose.msra.mxu0 0
      %489 = vmatprep.subr.bf16.mxu0 0
      %490 = vmatpush1.bf16.xpose.msra.mxu0 %v475
      %491 = vmatprep.subr.bf16.mxu0 0
      %492 = vmatpush1.bf16.xpose.msra.mxu0 %v472
      %493 = vmatprep.subr.bf16.mxu0 0
      %494 = vmatpush2.bf16.xpose.msra.mxu0 0
      %495 = vmatprep.subr.bf16.mxu0 0
      %496 = vmatpush2.bf16.xpose.msra.mxu0 0
      %497 = vmatprep.subr.bf16.mxu0 0
      %498 = vmatpush2.bf16.xpose.msra.mxu0 0
      %499 = vmatprep.subr.bf16.mxu0 0
      %500 = vmatpush2.bf16.xpose.msra.mxu0 0
      %501 = vmatprep.subr.bf16.mxu0 0
      %502 = vmatpush2.bf16.xpose.msra.mxu0 0
      %503 = vmatprep.subr.bf16.mxu0 0
      %504 = vmatpush2.bf16.xpose.msra.mxu0 0
      %505 = vmatprep.subr.bf16.mxu0 0
      %506 = vmatpush2.bf16.xpose.msra.mxu0 0
      %507 = vmatprep.subr.bf16.mxu0 0
      %508 = vmatpush2.bf16.xpose.msra.mxu0 0
      %509 = vmatprep.mubr.bf16.mxu0 0
      %510 = vmatmul.mubr.bf16.gmra.mxu0 %v466
      %v511 = vpop.f32.mrf.mxu0
      %v512 = vadd.f32 0.0, %v511
      %v513 = vpop.f32.mrf.mxu0
      %v514 = vpop.f32.mrf.mxu0
      %v515 = vadd.f32 0.0, %v514
      %v516 = vpop.f32.mrf.mxu0
      %517 = vmatprep.mubr.bf16.mxu0 0
      %518 = vmatmul.mubr.bf16.gmra.mxu0 %v469
      %v519 = vpop.f32.mrf.mxu0
      %v520 = vadd.f32 0.0, %v519
      %v521 = vpop.f32.mrf.mxu0
      %v522 = vpop.f32.mrf.mxu0
      %v523 = vpop.f32.mrf.mxu0
      %524 = vdwg.mxu0
      %v525 = vsel %vm190, %v512, -inf
      %526 = vmax.xlane.f32.xlu0 %v525
      %v527 = vpop.xlane.xlu0 %526
      %v528 = vsel %vm190, %v515, -inf
      %529 = vmax.xlane.f32.xlu0 %v528
      %v530 = vpop.xlane.xlu0 %529
      %v531 = vsel %vm197, %v520, -inf
      %532 = vmax.xlane.f32.xlu0 %v531
      %v533 = vpop.xlane.xlu0 %532
      %v534 = vsub.f32 %v512, %v527
      %v535 = vsub.f32 %v515, %v530
      %v536 = vsub.f32 %v520, %v533
      %v537 = vmul.f32 %v534, 1.442695
      %v538 = vpow.pop %v537
      %v539 = vmul.f32 %v535, 1.442695
      %v540 = vpow.pop %v539
      %v541 = vmul.f32 %v536, 1.442695
      %v542 = vpow.pop %v541
      %v543 = vsel %vm190, %v538, 0.0
      %544 = vadd.xlane.f32.xlu0 %v543
      %v545 = vpop.xlane.xlu0 %544
      %v546 = vsel %vm190, %v540, 0.0
      %547 = vadd.xlane.f32.xlu0 %v546
      %v548 = vpop.xlane.xlu0 %547
      %v549 = vsel %vm197, %v542, 0.0
      %550 = vadd.xlane.f32.xlu0 %v549
      %v551 = vpop.xlane.xlu0 %550
      %v552 = vrcp.pop %v545
      %v553 = vrcp.pop %v548
      %v554 = vrcp.pop %v551
      %v555 = vmul.f32 %v538, %v552
      %v556 = vmul.f32 %v540, %v553
      %v557 = vmul.f32 %v542, %v554
      %v558 = vpack.c.bf16 %v556, %v555
      %v559 = vpack.c.bf16 %v557, %v557
      %560 = vrot.lane.b32.xlu0 %v121, 48
      %v561 = vpop.permute.xlu0 %560
      %562 = vrot.lane.b32.xlu0 %v122, 48
      %v563 = vpop.permute.xlu0 %562
      %v566 = vsel %vm190, %v558, 0
      %v569 = vsel %vm190, %v559, 0
      %v572 = vand.u32 %v563, %v240
      %574 = vmatprep.subr.bf16.mxu0 0
      %575 = vmatpush1.bf16.msra.mxu0 0
      %576 = vmatprep.subr.bf16.mxu0 0
      %577 = vmatpush1.bf16.msra.mxu0 0
      %578 = vmatprep.subr.bf16.mxu0 0
      %579 = vmatpush1.bf16.msra.mxu0 0
      %580 = vmatprep.subr.bf16.mxu0 0
      %581 = vmatpush1.bf16.msra.mxu0 0
      %582 = vmatprep.subr.bf16.mxu0 0
      %583 = vmatpush1.bf16.msra.mxu0 0
      %584 = vmatprep.subr.bf16.mxu0 0
      %585 = vmatpush1.bf16.msra.mxu0 0
      %586 = vmatprep.subr.bf16.mxu0 0
      %587 = vmatpush1.bf16.msra.mxu0 %v572
      %588 = vmatprep.subr.bf16.mxu0 0
      %589 = vmatpush1.bf16.msra.mxu0 %v561
      %590 = vmatprep.subr.bf16.mxu0 0
      %591 = vmatpush2.bf16.msra.mxu0 0
      %592 = vmatprep.subr.bf16.mxu0 0
      %593 = vmatpush2.bf16.msra.mxu0 0
      %594 = vmatprep.subr.bf16.mxu0 0
      %595 = vmatpush2.bf16.msra.mxu0 0
      %596 = vmatprep.subr.bf16.mxu0 0
      %597 = vmatpush2.bf16.msra.mxu0 0
      %598 = vmatprep.subr.bf16.mxu0 0
      %599 = vmatpush2.bf16.msra.mxu0 0
      %600 = vmatprep.subr.bf16.mxu0 0
      %601 = vmatpush2.bf16.msra.mxu0 0
      %602 = vmatprep.subr.bf16.mxu0 0
      %603 = vmatpush2.bf16.msra.mxu0 0
      %604 = vmatprep.subr.bf16.mxu0 0
      %605 = vmatpush2.bf16.msra.mxu0 0
      %606 = vmatprep.mubr.bf16.mxu0 0
      %607 = vmatmul.mubr.bf16.gmra.mxu0 %v566
      %v608 = vpop.f32.mrf.mxu0
      %v609 = vadd.f32 0.0, %v608
      %v610 = vpop.f32.mrf.mxu0
      %v611 = vpop.f32.mrf.mxu0
      %v612 = vadd.f32 0.0, %v611
      %v613 = vpop.f32.mrf.mxu0
      %614 = vmatprep.mubr.bf16.mxu0 0
      %615 = vmatmul.mubr.bf16.gmra.mxu0 %v569
      %v616 = vpop.f32.mrf.mxu0
      %v617 = vadd.f32 0.0, %v616
      %v618 = vpop.f32.mrf.mxu0
      %v619 = vpop.f32.mrf.mxu0
      %v620 = vpop.f32.mrf.mxu0
      %621 = vdwg.mxu0
      %622 = vrot.lane.b32.xlu0 %v121, 104
      %v623 = vpop.permute.xlu0 %622
      %624 = vrot.lane.b32.xlu0 %v122, 104
      %v625 = vpop.permute.xlu0 %624
      %626 = vrot.lane.b32.xlu0 %v121, 72
      %v627 = vpop.permute.xlu0 %626
      %628 = vrot.lane.b32.xlu0 %v122, 72
      %v629 = vpop.permute.xlu0 %628
      %v631 = vsel %vm129, %v623, 0
      %v634 = vsel %vm129, %v625, 0
      %v637 = vsel %vm129, %v627, 0
      %v640 = vsel %vm129, %v629, 0
      %642 = vmatprep.subr.bf16.mxu0 0
      %643 = vmatpush1.bf16.xpose.msra.mxu0 0
      %644 = vmatprep.subr.bf16.mxu0 0
      %645 = vmatpush1.bf16.xpose.msra.mxu0 0
      %646 = vmatprep.subr.bf16.mxu0 0
      %647 = vmatpush1.bf16.xpose.msra.mxu0 0
      %648 = vmatprep.subr.bf16.mxu0 0
      %649 = vmatpush1.bf16.xpose.msra.mxu0 0
      %650 = vmatprep.subr.bf16.mxu0 0
      %651 = vmatpush1.bf16.xpose.msra.mxu0 0
      %652 = vmatprep.subr.bf16.mxu0 0
      %653 = vmatpush1.bf16.xpose.msra.mxu0 0
      %654 = vmatprep.subr.bf16.mxu0 0
      %655 = vmatpush1.bf16.xpose.msra.mxu0 %v640
      %656 = vmatprep.subr.bf16.mxu0 0
      %657 = vmatpush1.bf16.xpose.msra.mxu0 %v637
      %658 = vmatprep.subr.bf16.mxu0 0
      %659 = vmatpush2.bf16.xpose.msra.mxu0 0
      %660 = vmatprep.subr.bf16.mxu0 0
      %661 = vmatpush2.bf16.xpose.msra.mxu0 0
      %662 = vmatprep.subr.bf16.mxu0 0
      %663 = vmatpush2.bf16.xpose.msra.mxu0 0
      %664 = vmatprep.subr.bf16.mxu0 0
      %665 = vmatpush2.bf16.xpose.msra.mxu0 0
      %666 = vmatprep.subr.bf16.mxu0 0
      %667 = vmatpush2.bf16.xpose.msra.mxu0 0
      %668 = vmatprep.subr.bf16.mxu0 0
      %669 = vmatpush2.bf16.xpose.msra.mxu0 0
      %670 = vmatprep.subr.bf16.mxu0 0
      %671 = vmatpush2.bf16.xpose.msra.mxu0 0
      %672 = vmatprep.subr.bf16.mxu0 0
      %673 = vmatpush2.bf16.xpose.msra.mxu0 0
      %674 = vmatprep.mubr.bf16.mxu0 0
      %675 = vmatmul.mubr.bf16.gmra.mxu0 %v631
      %v676 = vpop.f32.mrf.mxu0
      %v677 = vadd.f32 0.0, %v676
      %v678 = vpop.f32.mrf.mxu0
      %v679 = vpop.f32.mrf.mxu0
      %v680 = vadd.f32 0.0, %v679
      %v681 = vpop.f32.mrf.mxu0
      %682 = vmatprep.mubr.bf16.mxu0 0
      %683 = vmatmul.mubr.bf16.gmra.mxu0 %v634
      %v684 = vpop.f32.mrf.mxu0
      %v685 = vadd.f32 0.0, %v684
      %v686 = vpop.f32.mrf.mxu0
      %v687 = vpop.f32.mrf.mxu0
      %v688 = vpop.f32.mrf.mxu0
      %689 = vdwg.mxu0
      %v690 = vsel %vm190, %v677, -inf
      %691 = vmax.xlane.f32.xlu0 %v690
      %v692 = vpop.xlane.xlu0 %691
      %v693 = vsel %vm190, %v680, -inf
      %694 = vmax.xlane.f32.xlu0 %v693
      %v695 = vpop.xlane.xlu0 %694
      %v696 = vsel %vm197, %v685, -inf
      %697 = vmax.xlane.f32.xlu0 %v696
      %v698 = vpop.xlane.xlu0 %697
      %v699 = vsub.f32 %v677, %v692
      %v700 = vsub.f32 %v680, %v695
      %v701 = vsub.f32 %v685, %v698
      %v702 = vmul.f32 %v699, 1.442695
      %v703 = vpow.pop %v702
      %v704 = vmul.f32 %v700, 1.442695
      %v705 = vpow.pop %v704
      %v706 = vmul.f32 %v701, 1.442695
      %v707 = vpow.pop %v706
      %v708 = vsel %vm190, %v703, 0.0
      %709 = vadd.xlane.f32.xlu0 %v708
      %v710 = vpop.xlane.xlu0 %709
      %v711 = vsel %vm190, %v705, 0.0
      %712 = vadd.xlane.f32.xlu0 %v711
      %v713 = vpop.xlane.xlu0 %712
      %v714 = vsel %vm197, %v707, 0.0
      %715 = vadd.xlane.f32.xlu0 %v714
      %v716 = vpop.xlane.xlu0 %715
      %v717 = vrcp.pop %v710
      %v718 = vrcp.pop %v713
      %v719 = vrcp.pop %v716
      %v720 = vmul.f32 %v703, %v717
      %v721 = vmul.f32 %v705, %v718
      %v722 = vmul.f32 %v707, %v719
      %v723 = vpack.c.bf16 %v721, %v720
      %v724 = vpack.c.bf16 %v722, %v722
      %725 = vrot.lane.b32.xlu0 %v121, 40
      %v726 = vpop.permute.xlu0 %725
      %727 = vrot.lane.b32.xlu0 %v122, 40
      %v728 = vpop.permute.xlu0 %727
      %v731 = vsel %vm190, %v723, 0
      %v734 = vsel %vm190, %v724, 0
      %v737 = vand.u32 %v728, %v240
      %739 = vmatprep.subr.bf16.mxu0 0
      %740 = vmatpush1.bf16.msra.mxu0 0
      %741 = vmatprep.subr.bf16.mxu0 0
      %742 = vmatpush1.bf16.msra.mxu0 0
      %743 = vmatprep.subr.bf16.mxu0 0
      %744 = vmatpush1.bf16.msra.mxu0 0
      %745 = vmatprep.subr.bf16.mxu0 0
      %746 = vmatpush1.bf16.msra.mxu0 0
      %747 = vmatprep.subr.bf16.mxu0 0
      %748 = vmatpush1.bf16.msra.mxu0 0
      %749 = vmatprep.subr.bf16.mxu0 0
      %750 = vmatpush1.bf16.msra.mxu0 0
      %751 = vmatprep.subr.bf16.mxu0 0
      %752 = vmatpush1.bf16.msra.mxu0 %v737
      %753 = vmatprep.subr.bf16.mxu0 0
      %754 = vmatpush1.bf16.msra.mxu0 %v726
      %755 = vmatprep.subr.bf16.mxu0 0
      %756 = vmatpush2.bf16.msra.mxu0 0
      %757 = vmatprep.subr.bf16.mxu0 0
      %758 = vmatpush2.bf16.msra.mxu0 0
      %759 = vmatprep.subr.bf16.mxu0 0
      %760 = vmatpush2.bf16.msra.mxu0 0
      %761 = vmatprep.subr.bf16.mxu0 0
      %762 = vmatpush2.bf16.msra.mxu0 0
      %763 = vmatprep.subr.bf16.mxu0 0
      %764 = vmatpush2.bf16.msra.mxu0 0
      %765 = vmatprep.subr.bf16.mxu0 0
      %766 = vmatpush2.bf16.msra.mxu0 0
      %767 = vmatprep.subr.bf16.mxu0 0
      %768 = vmatpush2.bf16.msra.mxu0 0
      %769 = vmatprep.subr.bf16.mxu0 0
      %770 = vmatpush2.bf16.msra.mxu0 0
      %771 = vmatprep.mubr.bf16.mxu0 0
      %772 = vmatmul.mubr.bf16.gmra.mxu0 %v731
      %v773 = vpop.f32.mrf.mxu0
      %v774 = vadd.f32 0.0, %v773
      %v775 = vpop.f32.mrf.mxu0
      %v776 = vpop.f32.mrf.mxu0
      %v777 = vadd.f32 0.0, %v776
      %v778 = vpop.f32.mrf.mxu0
      %779 = vmatprep.mubr.bf16.mxu0 0
      %780 = vmatmul.mubr.bf16.gmra.mxu0 %v734
      %v781 = vpop.f32.mrf.mxu0
      %v782 = vadd.f32 0.0, %v781
      %v783 = vpop.f32.mrf.mxu0
      %v784 = vpop.f32.mrf.mxu0
      %v785 = vpop.f32.mrf.mxu0
      %786 = vdwg.mxu0
      %790 = vrot.lane.b32.xlu0 %v444, 8
      %v791 = vpop.permute.xlu0 %790
      %792 = vrot.lane.b32.xlu0 %v447, 8
      %v793 = vpop.permute.xlu0 %792
      %794 = vrot.lane.b32.xlu0 %v452, 8
      %v795 = vpop.permute.xlu0 %794
      %802 = vrot.lane.b32.xlu0 %v609, 16
      %v803 = vpop.permute.xlu0 %802
      %804 = vrot.lane.b32.xlu0 %v612, 16
      %v805 = vpop.permute.xlu0 %804
      %806 = vrot.lane.b32.xlu0 %v617, 16
      %v807 = vpop.permute.xlu0 %806
      %814 = vrot.lane.b32.xlu0 %v774, 24
      %v815 = vpop.permute.xlu0 %814
      %816 = vrot.lane.b32.xlu0 %v777, 24
      %v817 = vpop.permute.xlu0 %816
      %818 = vrot.lane.b32.xlu0 %v782, 24
      %v819 = vpop.permute.xlu0 %818
      %v823 = vsel %vm129, %v279, %v791
      %v824 = vsel %vm129, %v282, %v793
      %v825 = vsel %vm129, %v287, %v795
      %vm826 = vcmask 130048
      %v827 = vsel %vm826, %v823, %v803
      %v828 = vsel %vm826, %v824, %v805
      %v829 = vsel %vm826, %v825, %v807
      %vm830 = vcmask 195584
      %v831 = vsel %vm830, %v827, %v815
      %v832 = vsel %vm830, %v828, %v817
      %v833 = vsel %vm830, %v829, %v819
      %vm834 = vcmask 261120
      %835 = vst.msk [vmem:[%s116] sm:$0xff] %vm834, %v831
      %836 = vst.msk [vmem:[%s116 + $0x8] sm:$0xff] %vm834, %v832
      %vm837 = vcmask 253952
      %838 = vst.msk [vmem:[%s116 + $0x10] sm:$0x1] %vm837, %v833
      %p839 = scmp.lt.s32.totalorder %s12, 1
      %s840 = scalar_select %p839, %s12, 1
      %s841 = smul.addr %s840, 3
      %s842 = smul.addr %s841, 8
      %s843 = scalar_lea.vmem %s1, %s842
      // Predicated region
      $region25: #{visual_encoder_forward.17} parent=23 // pred_check
        %p844 = pneg %p56
      $region26: #{visual_encoder_forward.17} parent=23 // pred_check_branch
        %846 = sbr.rel (%p844) target = $region28
      $region27: #{visual_encoder_forward.17} parent=23 // pred_region
        _
      $region28: #{visual_encoder_forward.17} parent=23 // pred_fallthru
        _
    $region24: #{visual_encoder_forward.17} parent=5 // pred_fallthru
      _
    %p847 = scmp.le.s32.totalorder 2, %s7
    // Predicated region
    $region29: #{visual_encoder_forward.17} parent=5 // pred_check
      %p848 = pneg %p847
    $region30: #{visual_encoder_forward.17} parent=5 // pred_check_branch
      %850 = sbr.rel (%p848) target = $region32
    $region31: #{visual_encoder_forward.17} parent=5 // pred_region
      %s851 = ssub.s32 %s7, 2
      // Predicated region
      $region33: #{visual_encoder_forward.17} parent=31 // pred_check
        %p852 = pneg %p62
      $region34: #{visual_encoder_forward.17} parent=31 // pred_check_branch
        %854 = sbr.rel (%p852) target = $region36
      $region35: #{visual_encoder_forward.17} parent=31 // pred_region
        %p855 = scmp.lt.s32.totalorder %s13, 1
        %s856 = scalar_select %p855, %s13, 1
        %s857 = smul.addr %s856, 3
        %s858 = smul.addr %s857, 8
        %s859 = scalar_lea.vmem %s1, %s858
      $region36: #{visual_encoder_forward.17} parent=31 // pred_fallthru
        _
    $region32: #{visual_encoder_forward.17} parent=5 // pred_fallthru
      _
  $region6: #{visual_encoder_forward.17} parent=0 // loop_footer
    %s11 = sadd.s32 1, %s7
  $region7: #{visual_encoder_forward.17} parent=0 // loop_footer_branch
    %6 = sbr.rel target = $region3
  $region8: #{visual_encoder_forward.17} parent=0 // loop_exit
    _

// kernel: visual_encoder_forward.18
$region0: #{visual_encoder_forward.18}
  #allocation0 [shape = 'u32[]', space=smem, size = 0x4, offset = 0x4, fixed_abs, tag = 'smem constant byte address 0x4 - core index']
  #allocation1 [shape = 'u32[144,128]{1,0:T(1,128)}', space=vmem, size = 0x12000, scoped, tag = 'internal scratch']
  %s0 = inlined_call_operand.vmem [shape: f32[34,32], index: 0, kind: input, shape index: {}]
  %s1 = inlined_call_operand.vmem [shape: bf16[32,32], index: 1, kind: input, shape index: {}]
  %s2 = inlined_call_operand.vmem [shape: f32[1,32], index: 2, kind: input, shape index: {}]
  %s3 = inlined_call_operand.vmem [shape: f32[34,32], index: 3, kind: input, shape index: {}]
  %s4 = inlined_call_operand.vmem [shape: f32[34,32], index: 4, kind: output, shape index: {}]
  %s5 = sld [smem:[#allocation0]]
  $region26: #{visual_encoder_forward.18} parent=0
    _
  %s7 = ssub.s32 1, %s5
  %s8 = scalar_select 0, %s7, %s5
  // Predicated region
  $region2: #{visual_encoder_forward.18} parent=0 // pred_check
    _
  $region3: #{visual_encoder_forward.18} parent=0 // pred_check_branch
    %10 = sbr.rel (0) target = $region5
  $region4: #{visual_encoder_forward.18} parent=0 // pred_region
    _
  $region5: #{visual_encoder_forward.18} parent=0 // pred_fallthru
    _
  // Predicated region
  $region6: #{visual_encoder_forward.18} parent=0 // pred_check
    _
  $region7: #{visual_encoder_forward.18} parent=0 // pred_check_branch
    %12 = sbr.rel (0) target = $region9
  $region8: #{visual_encoder_forward.18} parent=0 // pred_region
    _
  $region9: #{visual_encoder_forward.18} parent=0 // pred_fallthru
    _
  // Predicated region
  $region10: #{visual_encoder_forward.18} parent=0 // pred_check
    _
  $region11: #{visual_encoder_forward.18} parent=0 // pred_check_branch
    %14 = sbr.rel (0) target = $region13
  $region12: #{visual_encoder_forward.18} parent=0 // pred_region
    _
  $region13: #{visual_encoder_forward.18} parent=0 // pred_fallthru
    _
  // Predicated region
  $region14: #{visual_encoder_forward.18} parent=0 // pred_check
    _
  $region15: #{visual_encoder_forward.18} parent=0 // pred_check_branch
    %16 = sbr.rel (0) target = $region17
  $region16: #{visual_encoder_forward.18} parent=0 // pred_region
    _
  $region17: #{visual_encoder_forward.18} parent=0 // pred_fallthru
    _
  %v18 = vld [vmem:[%s0] sm:$0xff]
  %v19 = vld [vmem:[%s0 + $0x8] sm:$0xff]
  %v20 = vld [vmem:[%s0 + $0x10] sm:$0xff]
  %v21 = vld [vmem:[%s0 + $0x18] sm:$0xff]
  %v22 = vld [vmem:[%s0 + $0x20] sm:$0x3]
  %v23 = vpack.c.bf16 %v19, %v18
  %v24 = vpack.c.bf16 %v21, %v20
  %v25 = vpack.c.bf16 %v22, %v22
  %v26 = vld [vmem:[%s1] sm:$0xf]
  %v27 = vld [vmem:[%s1 + $0x4] sm:$0xf]
  %v28 = vld [vmem:[%s1 + $0x8] sm:$0xf]
  %v29 = vld [vmem:[%s1 + $0xc] sm:$0xf]
  %v30 = vld [vmem:[%s2] sm:$0x1]
  %v32 = vlaneseq
  %v33 = vshrl.u32 %v32, 7
  %v34 = vsub.s32 0, %v33
  %v35 = vrot.slane %v30, %v34
  %v41 = vunpack.c.l.b16 %v26
  %v42 = vunpack.c.l.b16 %v27
  %v43 = vunpack.c.l.b16 %v28
  %v44 = vunpack.c.l.b16 %v29
  %v45 = vpack.c.b16 %v42, %v41
  %v46 = vpack.c.b16 %v44, %v43
  %vm49 = vcmask 261120
  %v51 = vsel %vm49, %v23, 0
  %v54 = vsel %vm49, %v24, 0
  %v57 = vsel %vm49, %v25, 0
  %59 = vmatprep.subr.bf16.mxu0 0
  %60 = vmatpush1.bf16.msra.mxu0 0
  %61 = vmatprep.subr.bf16.mxu0 0
  %62 = vmatpush1.bf16.msra.mxu0 0
  %63 = vmatprep.subr.bf16.mxu0 0
  %64 = vmatpush1.bf16.msra.mxu0 0
  %65 = vmatprep.subr.bf16.mxu0 0
  %66 = vmatpush1.bf16.msra.mxu0 0
  %67 = vmatprep.subr.bf16.mxu0 0
  %68 = vmatpush1.bf16.msra.mxu0 0
  %69 = vmatprep.subr.bf16.mxu0 0
  %70 = vmatpush1.bf16.msra.mxu0 0
  %71 = vmatprep.subr.bf16.mxu0 0
  %72 = vmatpush1.bf16.msra.mxu0 %v46
  %73 = vmatprep.subr.bf16.mxu0 0
  %74 = vmatpush1.bf16.msra.mxu0 %v45
  %75 = vmatprep.subr.bf16.mxu0 0
  %76 = vmatpush2.bf16.msra.mxu0 0
  %77 = vmatprep.subr.bf16.mxu0 0
  %78 = vmatpush2.bf16.msra.mxu0 0
  %79 = vmatprep.subr.bf16.mxu0 0
  %80 = vmatpush2.bf16.msra.mxu0 0
  %81 = vmatprep.subr.bf16.mxu0 0
  %82 = vmatpush2.bf16.msra.mxu0 0
  %83 = vmatprep.subr.bf16.mxu0 0
  %84 = vmatpush2.bf16.msra.mxu0 0
  %85 = vmatprep.subr.bf16.mxu0 0
  %86 = vmatpush2.bf16.msra.mxu0 0
  %87 = vmatprep.subr.bf16.mxu0 0
  %88 = vmatpush2.bf16.msra.mxu0 0
  %89 = vmatprep.subr.bf16.mxu0 0
  %90 = vmatpush2.bf16.msra.mxu0 0
  %91 = vmatprep.mubr.bf16.mxu0 0
  %92 = vmatmul.mubr.bf16.gmra.mxu0 %v51
  %v93 = vpop.f32.mrf.mxu0
  %v94 = vadd.f32 %v35, %v93
  %v95 = vpop.f32.mrf.mxu0
  %v96 = vpop.f32.mrf.mxu0
  %v97 = vadd.f32 %v35, %v96
  %v98 = vpop.f32.mrf.mxu0
  %99 = vmatprep.mubr.bf16.mxu0 0
  %100 = vmatmul.mubr.bf16.gmra.mxu0 %v54
  %v101 = vpop.f32.mrf.mxu0
  %v102 = vadd.f32 %v35, %v101
  %v103 = vpop.f32.mrf.mxu0
  %v104 = vpop.f32.mrf.mxu0
  %v105 = vadd.f32 %v35, %v104
  %v106 = vpop.f32.mrf.mxu0
  %107 = vmatprep.mubr.bf16.mxu0 0
  %108 = vmatmul.mubr.bf16.gmra.mxu0 %v57
  %v109 = vpop.f32.mrf.mxu0
  %v110 = vadd.f32 %v35, %v109
  %v111 = vpop.f32.mrf.mxu0
  %v112 = vpop.f32.mrf.mxu0
  %v113 = vpop.f32.mrf.mxu0
  %114 = vdwg.mxu0
  %v115 = vld [vmem:[%s3] sm:$0xff]
  %v116 = vld [vmem:[%s3 + $0x8] sm:$0xff]
  %v117 = vld [vmem:[%s3 + $0x10] sm:$0xff]
  %v118 = vld [vmem:[%s3 + $0x18] sm:$0xff]
  %v119 = vld [vmem:[%s3 + $0x20] sm:$0x3]
  %v120 = vadd.f32 %v94, %v115
  %v121 = vadd.f32 %v97, %v116
  %v122 = vadd.f32 %v102, %v117
  %v123 = vadd.f32 %v105, %v118
  %v124 = vadd.f32 %v110, %v119
  %125 = vst.msk [vmem:[%s4] sm:$0xff] %vm49, %v120
  %126 = vst.msk [vmem:[%s4 + $0x8] sm:$0xff] %vm49, %v121
  %127 = vst.msk [vmem:[%s4 + $0x10] sm:$0xff] %vm49, %v122
  %128 = vst.msk [vmem:[%s4 + $0x18] sm:$0xff] %vm49, %v123
  %vm129 = vcmask 254976
  %130 = vst.msk [vmem:[%s4 + $0x20] sm:$0x3] %vm129, %v124
  // Predicated region
  $region18: #{visual_encoder_forward.18} parent=0 // pred_check
    _
  $region19: #{visual_encoder_forward.18} parent=0 // pred_check_branch
    %132 = sbr.rel (0) target = $region21
  $region20: #{visual_encoder_forward.18} parent=0 // pred_region
    _
  $region21: #{visual_encoder_forward.18} parent=0 // pred_fallthru
    _
  // Predicated region
  $region22: #{visual_encoder_forward.18} parent=0 // pred_check
    _
  $region23: #{visual_encoder_forward.18} parent=0 // pred_check_branch
    %134 = sbr.rel (0) target = $region25
  $region24: #{visual_encoder_forward.18} parent=0 // pred_region
    _
  $region25: #{visual_encoder_forward.18} parent=0 // pred_fallthru
    _

// kernel: visual_encoder_forward.19
$region0: #{visual_encoder_forward.19}
  #allocation0 [shape = 'u32[]', space=smem, size = 0x4, offset = 0x4, fixed_abs, tag = 'smem constant byte address 0x4 - core index']
  #allocation1 [shape = 'u32[144,128]{1,0:T(1,128)}', space=vmem, size = 0x12000, scoped, tag = 'internal scratch']
  %s0 = inlined_call_operand.vmem [shape: f32[34,32], index: 0, kind: input, shape index: {}]
  %s1 = inlined_call_operand.vmem [shape: bf16[32,128], index: 1, kind: input, shape index: {}]
  %s2 = inlined_call_operand.vmem [shape: f32[1,128], index: 2, kind: input, shape index: {}]
  %s3 = inlined_call_operand.vmem [shape: f32[1,32], index: 3, kind: input, shape index: {}]
  %s4 = inlined_call_operand.vmem [shape: f32[1,32], index: 4, kind: input, shape index: {}]
  %s5 = inlined_call_operand.vmem [shape: f32[34,128], index: 5, kind: output, shape index: {}]
  %s6 = sld [smem:[#allocation0]]
  $region30: #{visual_encoder_forward.19} parent=0
    _
  %s8 = ssub.s32 1, %s6
  %s9 = scalar_select 0, %s8, %s6
  // Predicated region
  $region2: #{visual_encoder_forward.19} parent=0 // pred_check
    _
  $region3: #{visual_encoder_forward.19} parent=0 // pred_check_branch
    %11 = sbr.rel (0) target = $region5
  $region4: #{visual_encoder_forward.19} parent=0 // pred_region
    _
  $region5: #{visual_encoder_forward.19} parent=0 // pred_fallthru
    _
  // Predicated region
  $region6: #{visual_encoder_forward.19} parent=0 // pred_check
    _
  $region7: #{visual_encoder_forward.19} parent=0 // pred_check_branch
    %13 = sbr.rel (0) target = $region9
  $region8: #{visual_encoder_forward.19} parent=0 // pred_region
    _
  $region9: #{visual_encoder_forward.19} parent=0 // pred_fallthru
    _
  // Predicated region
  $region10: #{visual_encoder_forward.19} parent=0 // pred_check
    _
  $region11: #{visual_encoder_forward.19} parent=0 // pred_check_branch
    %15 = sbr.rel (0) target = $region13
  $region12: #{visual_encoder_forward.19} parent=0 // pred_region
    _
  $region13: #{visual_encoder_forward.19} parent=0 // pred_fallthru
    _
  // Predicated region
  $region14: #{visual_encoder_forward.19} parent=0 // pred_check
    _
  $region15: #{visual_encoder_forward.19} parent=0 // pred_check_branch
    %17 = sbr.rel (0) target = $region17
  $region16: #{visual_encoder_forward.19} parent=0 // pred_region
    _
  $region17: #{visual_encoder_forward.19} parent=0 // pred_fallthru
    _
  // Predicated region
  $region18: #{visual_encoder_forward.19} parent=0 // pred_check
    _
  $region19: #{visual_encoder_forward.19} parent=0 // pred_check_branch
    %19 = sbr.rel (0) target = $region21
  $region20: #{visual_encoder_forward.19} parent=0 // pred_region
    _
  $region21: #{visual_encoder_forward.19} parent=0 // pred_fallthru
    _
  %v21 = vld [vmem:[%s0] sm:$0xff]
  %v22 = vld [vmem:[%s0 + $0x8] sm:$0xff]
  %v23 = vld [vmem:[%s0 + $0x10] sm:$0xff]
  %v24 = vld [vmem:[%s0 + $0x18] sm:$0xff]
  %v25 = vld [vmem:[%s0 + $0x20] sm:$0x3]
  %vm26 = vcmask 261120
  %v27 = vsel %vm26, %v21, 0.0
  %28 = vadd.xlane.f32.xlu0 %v27
  %v29 = vpop.xlane.xlu0 %28
  %v30 = vsel %vm26, %v22, 0.0
  %31 = vadd.xlane.f32.xlu0 %v30
  %v32 = vpop.xlane.xlu0 %31
  %v33 = vsel %vm26, %v23, 0.0
  %34 = vadd.xlane.f32.xlu0 %v33
  %v35 = vpop.xlane.xlu0 %34
  %v36 = vsel %vm26, %v24, 0.0
  %37 = vadd.xlane.f32.xlu0 %v36
  %v38 = vpop.xlane.xlu0 %37
  %vm39 = vcmask 254976
  %v40 = vsel %vm39, %v25, 0.0
  %41 = vadd.xlane.f32.xlu0 %v40
  %v42 = vpop.xlane.xlu0 %41
  %v43 = vrcp.pop 32.0
  %v44 = vmul.f32 %v29, %v43
  %v45 = vmul.f32 %v32, %v43
  %v46 = vmul.f32 %v35, %v43
  %v47 = vmul.f32 %v38, %v43
  %v48 = vmul.f32 %v42, %v43
  %v49 = vsub.f32 %v21, %v44
  %v50 = vsub.f32 %v22, %v45
  %v51 = vsub.f32 %v23, %v46
  %v52 = vsub.f32 %v24, %v47
  %v53 = vsub.f32 %v25, %v48
  %v54 = vmul.f32 %v49, %v49
  %v55 = vmul.f32 %v50, %v50
  %v56 = vmul.f32 %v51, %v51
  %v57 = vmul.f32 %v52, %v52
  %v58 = vmul.f32 %v53, %v53
  %v59 = vsel %vm26, %v54, 0.0
  %60 = vadd.xlane.f32.xlu0 %v59
  %v61 = vpop.xlane.xlu0 %60
  %v62 = vsel %vm26, %v55, 0.0
  %63 = vadd.xlane.f32.xlu0 %v62
  %v64 = vpop.xlane.xlu0 %63
  %v65 = vsel %vm26, %v56, 0.0
  %66 = vadd.xlane.f32.xlu0 %v65
  %v67 = vpop.xlane.xlu0 %66
  %v68 = vsel %vm26, %v57, 0.0
  %69 = vadd.xlane.f32.xlu0 %v68
  %v70 = vpop.xlane.xlu0 %69
  %v71 = vsel %vm39, %v58, 0.0
  %72 = vadd.xlane.f32.xlu0 %v71
  %v73 = vpop.xlane.xlu0 %72
  %v74 = vmul.f32 %v61, %v43
  %v75 = vmul.f32 %v64, %v43
  %v76 = vmul.f32 %v67, %v43
  %v77 = vmul.f32 %v70, %v43
  %v78 = vmul.f32 %v73, %v43
  %v79 = vadd.f32 %v74, 1e-05
  %v80 = vadd.f32 %v75, 1e-05
  %v81 = vadd.f32 %v76, 1e-05
  %v82 = vadd.f32 %v77, 1e-05
  %v83 = vadd.f32 %v78, 1e-05
  %v84 = vrsqrt.pop %v79
  %v85 = vrsqrt.pop %v80
  %v86 = vrsqrt.pop %v81
  %v87 = vrsqrt.pop %v82
  %v88 = vrsqrt.pop %v83
  %v89 = vmul.f32 %v49, %v84
  %v90 = vmul.f32 %v50, %v85
  %v91 = vmul.f32 %v51, %v86
  %v92 = vmul.f32 %v52, %v87
  %v93 = vmul.f32 %v53, %v88
  %v94 = vld [vmem:[%s3] sm:$0x1]
  %v96 = vlaneseq
  %v97 = vshrl.u32 %v96, 7
  %v98 = vsub.s32 0, %v97
  %v99 = vrot.slane %v94, %v98
  %v101 = vmul.f32 %v89, %v99
  %v102 = vmul.f32 %v90, %v99
  %v103 = vmul.f32 %v91, %v99
  %v104 = vmul.f32 %v92, %v99
  %v105 = vmul.f32 %v93, %v99
  %v106 = vld [vmem:[%s4] sm:$0x1]
  %v108 = vlaneseq
  %v109 = vshrl.u32 %v108, 7
  %v110 = vsub.s32 0, %v109
  %v111 = vrot.slane %v106, %v110
  %v113 = vadd.f32 %v101, %v111
  %v114 = vadd.f32 %v102, %v111
  %v115 = vadd.f32 %v103, %v111
  %v116 = vadd.f32 %v104, %v111
  %v117 = vadd.f32 %v105, %v111
  %v118 = vpack.c.bf16 %v114, %v113
  %v119 = vpack.c.bf16 %v116, %v115
  %v120 = vpack.c.bf16 %v117, %v117
  %v121 = vld [vmem:[%s1] sm:$0xf]
  %v122 = vld [vmem:[%s1 + $0x4] sm:$0xf]
  %v123 = vld [vmem:[%s1 + $0x8] sm:$0xf]
  %v124 = vld [vmem:[%s1 + $0xc] sm:$0xf]
  %v125 = vld [vmem:[%s2] sm:$0x1]
  %v127 = vlaneseq
  %v128 = vshrl.u32 %v127, 7
  %v129 = vsub.s32 0, %v128
  %v130 = vrot.slane %v125, %v129
  %v136 = vunpack.c.l.b16 %v121
  %v137 = vunpack.c.l.b16 %v122
  %v138 = vunpack.c.l.b16 %v123
  %v139 = vunpack.c.l.b16 %v124
  %v140 = vpack.c.b16 %v137, %v136
  %v141 = vpack.c.b16 %v139, %v138
  %v145 = vsel %vm26, %v118, 0
  %v148 = vsel %vm26, %v119, 0
  %v151 = vsel %vm26, %v120, 0
  %153 = vmatprep.subr.bf16.mxu0 0
  %154 = vmatpush1.bf16.msra.mxu0 0
  %155 = vmatprep.subr.bf16.mxu0 0
  %156 = vmatpush1.bf16.msra.mxu0 0
  %157 = vmatprep.subr.bf16.mxu0 0
  %158 = vmatpush1.bf16.msra.mxu0 0
  %159 = vmatprep.subr.bf16.mxu0 0
  %160 = vmatpush1.bf16.msra.mxu0 0
  %161 = vmatprep.subr.bf16.mxu0 0
  %162 = vmatpush1.bf16.msra.mxu0 0
  %163 = vmatprep.subr.bf16.mxu0 0
  %164 = vmatpush1.bf16.msra.mxu0 0
  %165 = vmatprep.subr.bf16.mxu0 0
  %166 = vmatpush1.bf16.msra.mxu0 %v141
  %167 = vmatprep.subr.bf16.mxu0 0
  %168 = vmatpush1.bf16.msra.mxu0 %v140
  %169 = vmatprep.subr.bf16.mxu0 0
  %170 = vmatpush2.bf16.msra.mxu0 0
  %171 = vmatprep.subr.bf16.mxu0 0
  %172 = vmatpush2.bf16.msra.mxu0 0
  %173 = vmatprep.subr.bf16.mxu0 0
  %174 = vmatpush2.bf16.msra.mxu0 0
  %175 = vmatprep.subr.bf16.mxu0 0
  %176 = vmatpush2.bf16.msra.mxu0 0
  %177 = vmatprep.subr.bf16.mxu0 0
  %178 = vmatpush2.bf16.msra.mxu0 0
  %179 = vmatprep.subr.bf16.mxu0 0
  %180 = vmatpush2.bf16.msra.mxu0 0
  %181 = vmatprep.subr.bf16.mxu0 0
  %182 = vmatpush2.bf16.msra.mxu0 0
  %183 = vmatprep.subr.bf16.mxu0 0
  %184 = vmatpush2.bf16.msra.mxu0 0
  %185 = vmatprep.mubr.bf16.mxu0 0
  %186 = vmatmul.mubr.bf16.gmra.mxu0 %v145
  %v187 = vpop.f32.mrf.mxu0
  %v188 = vadd.f32 %v130, %v187
  %v189 = vpop.f32.mrf.mxu0
  %v190 = vpop.f32.mrf.mxu0
  %v191 = vadd.f32 %v130, %v190
  %v192 = vpop.f32.mrf.mxu0
  %193 = vmatprep.mubr.bf16.mxu0 0
  %194 = vmatmul.mubr.bf16.gmra.mxu0 %v148
  %v195 = vpop.f32.mrf.mxu0
  %v196 = vadd.f32 %v130, %v195
  %v197 = vpop.f32.mrf.mxu0
  %v198 = vpop.f32.mrf.mxu0
  %v199 = vadd.f32 %v130, %v198
  %v200 = vpop.f32.mrf.mxu0
  %201 = vmatprep.mubr.bf16.mxu0 0
  %202 = vmatmul.mubr.bf16.gmra.mxu0 %v151
  %v203 = vpop.f32.mrf.mxu0
  %v204 = vadd.f32 %v130, %v203
  %v205 = vpop.f32.mrf.mxu0
  %v206 = vpop.f32.mrf.mxu0
  %v207 = vpop.f32.mrf.mxu0
  %208 = vdwg.mxu0
  %v209 = vmul.f32 %v188, 1.702
  %v210 = vmul.f32 %v191, 1.702
  %v211 = vmul.f32 %v196, 1.702
  %v212 = vmul.f32 %v199, 1.702
  %v213 = vmul.f32 %v204, 1.702
  %v214 = vxor.u32 %v209, 2147483648
  %v215 = vxor.u32 %v210, 2147483648
  %v216 = vxor.u32 %v211, 2147483648
  %v217 = vxor.u32 %v212, 2147483648
  %v218 = vxor.u32 %v213, 2147483648
  %v219 = vmul.f32 %v214, 1.442695
  %v220 = vpow.pop %v219
  %v221 = vmul.f32 %v215, 1.442695
  %v222 = vpow.pop %v221
  %v223 = vmul.f32 %v216, 1.442695
  %v224 = vpow.pop %v223
  %v225 = vmul.f32 %v217, 1.442695
  %v226 = vpow.pop %v225
  %v227 = vmul.f32 %v218, 1.442695
  %v228 = vpow.pop %v227
  %v229 = vadd.f32 %v220, 1.0
  %v230 = vadd.f32 %v222, 1.0
  %v231 = vadd.f32 %v224, 1.0
  %v232 = vadd.f32 %v226, 1.0
  %v233 = vadd.f32 %v228, 1.0
  %v234 = vrcp.pop %v229
  %v235 = vmul.f32 1.0, %v234
  %v236 = vrcp.pop %v230
  %v237 = vmul.f32 1.0, %v236
  %v238 = vrcp.pop %v231
  %v239 = vmul.f32 1.0, %v238
  %v240 = vrcp.pop %v232
  %v241 = vmul.f32 1.0, %v240
  %v242 = vrcp.pop %v233
  %v243 = vmul.f32 1.0, %v242
  %v244 = vmul.f32 %v188, %v235
  %v245 = vmul.f32 %v191, %v237
  %v246 = vmul.f32 %v196, %v239
  %v247 = vmul.f32 %v199, %v241
  %v248 = vmul.f32 %v204, %v243
  %249 = vst [vmem:[%s5] sm:$0xff] %v244
  %250 = vst [vmem:[%s5 + $0x8] sm:$0xff] %v245
  %251 = vst [vmem:[%s5 + $0x10] sm:$0xff] %v246
  %252 = vst [vmem:[%s5 + $0x18] sm:$0xff] %v247
  %253 = vst [vmem:[%s5 + $0x20] sm:$0x3] %v248
  // Predicated region
  $region22: #{visual_encoder_forward.19} parent=0 // pred_check
    _
  $region23: #{visual_encoder_forward.19} parent=0 // pred_check_branch
    %255 = sbr.rel (0) target = $region25
  $region24: #{visual_encoder_forward.19} parent=0 // pred_region
    _
  $region25: #{visual_encoder_forward.19} parent=0 // pred_fallthru
    _
  // Predicated region
  $region26: #{visual_encoder_forward.19} parent=0 // pred_check
    _
  $region27: #{visual_encoder_forward.19} parent=0 // pred_check_branch
    %257 = sbr.rel (0) target = $region29
  $region28: #{visual_encoder_forward.19} parent=0 // pred_region
    _
  $region29: #{visual_encoder_forward.19} parent=0 // pred_fallthru
    _

// kernel: visual_encoder_forward.20
$region0: #{visual_encoder_forward.20}
  #allocation0 [shape = 'u32[]', space=smem, size = 0x4, offset = 0x4, fixed_abs, tag = 'smem constant byte address 0x4 - core index']
  #allocation1 [shape = 'u32[144,128]{1,0:T(1,128)}', space=vmem, size = 0x12000, scoped, tag = 'internal scratch']
  %s0 = inlined_call_operand.vmem [shape: f32[34,128], index: 0, kind: input, shape index: {}]
  %s1 = inlined_call_operand.vmem [shape: bf16[128,32], index: 1, kind: input, shape index: {}]
  %s2 = inlined_call_operand.vmem [shape: f32[1,32], index: 2, kind: input, shape index: {}]
  %s3 = inlined_call_operand.vmem [shape: f32[34,32], index: 3, kind: input, shape index: {}]
  %s4 = inlined_call_operand.vmem [shape: f32[34,32], index: 4, kind: output, shape index: {}]
  %s5 = sld [smem:[#allocation0]]
  $region26: #{visual_encoder_forward.20} parent=0
    _
  %s7 = ssub.s32 1, %s5
  %s8 = scalar_select 0, %s7, %s5
  // Predicated region
  $region2: #{visual_encoder_forward.20} parent=0 // pred_check
    _
  $region3: #{visual_encoder_forward.20} parent=0 // pred_check_branch
    %10 = sbr.rel (0) target = $region5
  $region4: #{visual_encoder_forward.20} parent=0 // pred_region
    _
  $region5: #{visual_encoder_forward.20} parent=0 // pred_fallthru
    _
  // Predicated region
  $region6: #{visual_encoder_forward.20} parent=0 // pred_check
    _
  $region7: #{visual_encoder_forward.20} parent=0 // pred_check_branch
    %12 = sbr.rel (0) target = $region9
  $region8: #{visual_encoder_forward.20} parent=0 // pred_region
    _
  $region9: #{visual_encoder_forward.20} parent=0 // pred_fallthru
    _
  // Predicated region
  $region10: #{visual_encoder_forward.20} parent=0 // pred_check
    _
  $region11: #{visual_encoder_forward.20} parent=0 // pred_check_branch
    %14 = sbr.rel (0) target = $region13
  $region12: #{visual_encoder_forward.20} parent=0 // pred_region
    _
  $region13: #{visual_encoder_forward.20} parent=0 // pred_fallthru
    _
  // Predicated region
  $region14: #{visual_encoder_forward.20} parent=0 // pred_check
    _
  $region15: #{visual_encoder_forward.20} parent=0 // pred_check_branch
    %16 = sbr.rel (0) target = $region17
  $region16: #{visual_encoder_forward.20} parent=0 // pred_region
    _
  $region17: #{visual_encoder_forward.20} parent=0 // pred_fallthru
    _
  %v18 = vld [vmem:[%s0] sm:$0xff]
  %v19 = vld [vmem:[%s0 + $0x8] sm:$0xff]
  %v20 = vld [vmem:[%s0 + $0x10] sm:$0xff]
  %v21 = vld [vmem:[%s0 + $0x18] sm:$0xff]
  %v22 = vld [vmem:[%s0 + $0x20] sm:$0x3]
  %v23 = vpack.c.bf16 %v19, %v18
  %v24 = vpack.c.bf16 %v21, %v20
  %v25 = vpack.c.bf16 %v22, %v22
  %v26 = vld [vmem:[%s1] sm:$0xf]
  %v27 = vld [vmem:[%s1 + $0x4] sm:$0xf]
  %v28 = vld [vmem:[%s1 + $0x8] sm:$0xf]
  %v29 = vld [vmem:[%s1 + $0xc] sm:$0xf]
  %v30 = vld [vmem:[%s1 + $0x10] sm:$0xf]
  %v31 = vld [vmem:[%s1 + $0x14] sm:$0xf]
  %v32 = vld [vmem:[%s1 + $0x18] sm:$0xf]
  %v33 = vld [vmem:[%s1 + $0x1c] sm:$0xf]
  %v34 = vld [vmem:[%s1 + $0x20] sm:$0xf]
  %v35 = vld [vmem:[%s1 + $0x24] sm:$0xf]
  %v36 = vld [vmem:[%s1 + $0x28] sm:$0xf]
  %v37 = vld [vmem:[%s1 + $0x2c] sm:$0xf]
  %v38 = vld [vmem:[%s1 + $0x30] sm:$0xf]
  %v39 = vld [vmem:[%s1 + $0x34] sm:$0xf]
  %v40 = vld [vmem:[%s1 + $0x38] sm:$0xf]
  %v41 = vld [vmem:[%s1 + $0x3c] sm:$0xf]
  %v42 = vld [vmem:[%s2] sm:$0x1]
  %v44 = vlaneseq
  %v45 = vshrl.u32 %v44, 7
  %v46 = vsub.s32 0, %v45
  %v47 = vrot.slane %v42, %v46
  %v65 = vunpack.c.l.b16 %v26
  %v66 = vunpack.c.l.b16 %v27
  %v67 = vunpack.c.l.b16 %v28
  %v68 = vunpack.c.l.b16 %v29
  %v69 = vunpack.c.l.b16 %v30
  %v70 = vunpack.c.l.b16 %v31
  %v71 = vunpack.c.l.b16 %v32
  %v72 = vunpack.c.l.b16 %v33
  %v73 = vunpack.c.l.b16 %v34
  %v74 = vunpack.c.l.b16 %v35
  %v75 = vunpack.c.l.b16 %v36
  %v76 = vunpack.c.l.b16 %v37
  %v77 = vunpack.c.l.b16 %v38
  %v78 = vunpack.c.l.b16 %v39
  %v79 = vunpack.c.l.b16 %v40
  %v80 = vunpack.c.l.b16 %v41
  %v81 = vpack.c.b16 %v66, %v65
  %v82 = vpack.c.b16 %v68, %v67
  %v83 = vpack.c.b16 %v70, %v69
  %v84 = vpack.c.b16 %v72, %v71
  %v85 = vpack.c.b16 %v74, %v73
  %v86 = vpack.c.b16 %v76, %v75
  %v87 = vpack.c.b16 %v78, %v77
  %v88 = vpack.c.b16 %v80, %v79
  %97 = vmatprep.subr.bf16.mxu0 0
  %98 = vmatpush1.bf16.msra.mxu0 %v88
  %99 = vmatprep.subr.bf16.mxu0 0
  %100 = vmatpush1.bf16.msra.mxu0 %v87
  %101 = vmatprep.subr.bf16.mxu0 0
  %102 = vmatpush1.bf16.msra.mxu0 %v86
  %103 = vmatprep.subr.bf16.mxu0 0
  %104 = vmatpush1.bf16.msra.mxu0 %v85
  %105 = vmatprep.subr.bf16.mxu0 0
  %106 = vmatpush1.bf16.msra.mxu0 %v84
  %107 = vmatprep.subr.bf16.mxu0 0
  %108 = vmatpush1.bf16.msra.mxu0 %v83
  %109 = vmatprep.subr.bf16.mxu0 0
  %110 = vmatpush1.bf16.msra.mxu0 %v82
  %111 = vmatprep.subr.bf16.mxu0 0
  %112 = vmatpush1.bf16.msra.mxu0 %v81
  %113 = vmatprep.subr.bf16.mxu0 0
  %114 = vmatpush2.bf16.msra.mxu0 0
  %115 = vmatprep.subr.bf16.mxu0 0
  %116 = vmatpush2.bf16.msra.mxu0 0
  %117 = vmatprep.subr.bf16.mxu0 0
  %118 = vmatpush2.bf16.msra.mxu0 0
  %119 = vmatprep.subr.bf16.mxu0 0
  %120 = vmatpush2.bf16.msra.mxu0 0
  %121 = vmatprep.subr.bf16.mxu0 0
  %122 = vmatpush2.bf16.msra.mxu0 0
  %123 = vmatprep.subr.bf16.mxu0 0
  %124 = vmatpush2.bf16.msra.mxu0 0
  %125 = vmatprep.subr.bf16.mxu0 0
  %126 = vmatpush2.bf16.msra.mxu0 0
  %127 = vmatprep.subr.bf16.mxu0 0
  %128 = vmatpush2.bf16.msra.mxu0 0
  %129 = vmatprep.mubr.bf16.mxu0 0
  %130 = vmatmul.mubr.bf16.gmra.mxu0 %v23
  %v131 = vpop.f32.mrf.mxu0
  %v132 = vadd.f32 %v47, %v131
  %v133 = vpop.f32.mrf.mxu0
  %v134 = vpop.f32.mrf.mxu0
  %v135 = vadd.f32 %v47, %v134
  %v136 = vpop.f32.mrf.mxu0
  %137 = vmatprep.mubr.bf16.mxu0 0
  %138 = vmatmul.mubr.bf16.gmra.mxu0 %v24
  %v139 = vpop.f32.mrf.mxu0
  %v140 = vadd.f32 %v47, %v139
  %v141 = vpop.f32.mrf.mxu0
  %v142 = vpop.f32.mrf.mxu0
  %v143 = vadd.f32 %v47, %v142
  %v144 = vpop.f32.mrf.mxu0
  %145 = vmatprep.mubr.bf16.mxu0 0
  %146 = vmatmul.mubr.bf16.gmra.mxu0 %v25
  %v147 = vpop.f32.mrf.mxu0
  %v148 = vadd.f32 %v47, %v147
  %v149 = vpop.f32.mrf.mxu0
  %v150 = vpop.f32.mrf.mxu0
  %v151 = vpop.f32.mrf.mxu0
  %152 = vdwg.mxu0
  %v153 = vld [vmem:[%s3] sm:$0xff]
  %v154 = vld [vmem:[%s3 + $0x8] sm:$0xff]
  %v155 = vld [vmem:[%s3 + $0x10] sm:$0xff]
  %v156 = vld [vmem:[%s3 + $0x18] sm:$0xff]
  %v157 = vld [vmem:[%s3 + $0x20] sm:$0x3]
  %v158 = vadd.f32 %v132, %v153
  %v159 = vadd.f32 %v135, %v154
  %v160 = vadd.f32 %v140, %v155
  %v161 = vadd.f32 %v143, %v156
  %v162 = vadd.f32 %v148, %v157
  %vm163 = vcmask 261120
  %164 = vst.msk [vmem:[%s4] sm:$0xff] %vm163, %v158
  %165 = vst.msk [vmem:[%s4 + $0x8] sm:$0xff] %vm163, %v159
  %166 = vst.msk [vmem:[%s4 + $0x10] sm:$0xff] %vm163, %v160
  %167 = vst.msk [vmem:[%s4 + $0x18] sm:$0xff] %vm163, %v161
  %vm168 = vcmask 254976
  %169 = vst.msk [vmem:[%s4 + $0x20] sm:$0x3] %vm168, %v162
  // Predicated region
  $region18: #{visual_encoder_forward.20} parent=0 // pred_check
    _
  $region19: #{visual_encoder_forward.20} parent=0 // pred_check_branch
    %171 = sbr.rel (0) target = $region21
  $region20: #{visual_encoder_forward.20} parent=0 // pred_region
    _
  $region21: #{visual_encoder_forward.20} parent=0 // pred_fallthru
    _
  // Predicated region
  $region22: #{visual_encoder_forward.20} parent=0 // pred_check
    _
  $region23: #{visual_encoder_forward.20} parent=0 // pred_check_branch
    %173 = sbr.rel (0) target = $region25
  $region24: #{visual_encoder_forward.20} parent=0 // pred_region
    _
  $region25: #{visual_encoder_forward.20} parent=0 // pred_fallthru
    _

// kernel: visual_encoder_forward.27
$region0: #{visual_encoder_forward.27}
  #allocation0 [shape = 'u32[]', space=smem, size = 0x4, offset = 0x4, fixed_abs, tag = 'smem constant byte address 0x4 - core index']
  #allocation1 [shape = 'u32[144,128]{1,0:T(1,128)}', space=vmem, size = 0x12000, scoped, tag = 'internal scratch']
  %s0 = inlined_call_operand.vmem [shape: f32[2,32], index: 0, kind: input, shape index: {}]
  %s1 = inlined_call_operand.vmem [shape: bf16[32,16], index: 1, kind: input, shape index: {}]
  %s2 = inlined_call_operand.hbm [shape: f32[2,16], index: 2, kind: output, shape index: {}]
  %s3 = sld [smem:[#allocation0]]
  $region18: #{visual_encoder_forward.27} parent=0
    _
  %s5 = ssub.s32 1, %s3
  %s6 = scalar_select 0, %s5, %s3
  $region1: #{visual_encoder_forward.27} parent=0
    #allocation2 [shape = 'u8[1024]{0}', space=vmem, size = 0x400, scoped, tag = 'output window, operand 0, single buffered']
    #allocation3 [shape = 's32[1]{0}', space=sflag, size = 0x4, scoped, tag = 'scoped memory for visual_encoder_forward.27']
    %7 = vsyncpa [#allocation3], 0
    // Predicated region
    $region2: #{visual_encoder_forward.27} parent=1 // pred_check
      _
    $region3: #{visual_encoder_forward.27} parent=1 // pred_check_branch
      %9 = sbr.rel (0) target = $region5
    $region4: #{visual_encoder_forward.27} parent=1 // pred_region
      _
    $region5: #{visual_encoder_forward.27} parent=1 // pred_fallthru
      _
    // Predicated region
    $region6: #{visual_encoder_forward.27} parent=1 // pred_check
      _
    $region7: #{visual_encoder_forward.27} parent=1 // pred_check_branch
      %11 = sbr.rel (0) target = $region9
    $region8: #{visual_encoder_forward.27} parent=1 // pred_region
      _
    $region9: #{visual_encoder_forward.27} parent=1 // pred_fallthru
      _
    %v13 = vld [vmem:[%s0] sm:$0x3]
    %v14 = vpack.c.bf16 %v13, %v13
    %v15 = vld [vmem:[%s1] sm:$0xf]
    %v16 = vld [vmem:[%s1 + $0x4] sm:$0xf]
    %v17 = vld [vmem:[%s1 + $0x8] sm:$0xf]
    %v18 = vld [vmem:[%s1 + $0xc] sm:$0xf]
    %v23 = vunpack.c.l.b16 %v15
    %v24 = vunpack.c.l.b16 %v16
    %v25 = vunpack.c.l.b16 %v17
    %v26 = vunpack.c.l.b16 %v18
    %v27 = vpack.c.b16 %v24, %v23
    %v28 = vpack.c.b16 %v26, %v25
    %vm31 = vcmask 261120
    %v33 = vsel %vm31, %v14, 0
    %35 = vmatprep.subr.bf16.mxu0 0
    %36 = vmatpush1.bf16.msra.mxu0 0
    %37 = vmatprep.subr.bf16.mxu0 0
    %38 = vmatpush1.bf16.msra.mxu0 0
    %39 = vmatprep.subr.bf16.mxu0 0
    %40 = vmatpush1.bf16.msra.mxu0 0
    %41 = vmatprep.subr.bf16.mxu0 0
    %42 = vmatpush1.bf16.msra.mxu0 0
    %43 = vmatprep.subr.bf16.mxu0 0
    %44 = vmatpush1.bf16.msra.mxu0 0
    %45 = vmatprep.subr.bf16.mxu0 0
    %46 = vmatpush1.bf16.msra.mxu0 0
    %47 = vmatprep.subr.bf16.mxu0 0
    %48 = vmatpush1.bf16.msra.mxu0 %v28
    %49 = vmatprep.subr.bf16.mxu0 0
    %50 = vmatpush1.bf16.msra.mxu0 %v27
    %51 = vmatprep.subr.bf16.mxu0 0
    %52 = vmatpush2.bf16.msra.mxu0 0
    %53 = vmatprep.subr.bf16.mxu0 0
    %54 = vmatpush2.bf16.msra.mxu0 0
    %55 = vmatprep.subr.bf16.mxu0 0
    %56 = vmatpush2.bf16.msra.mxu0 0
    %57 = vmatprep.subr.bf16.mxu0 0
    %58 = vmatpush2.bf16.msra.mxu0 0
    %59 = vmatprep.subr.bf16.mxu0 0
    %60 = vmatpush2.bf16.msra.mxu0 0
    %61 = vmatprep.subr.bf16.mxu0 0
    %62 = vmatpush2.bf16.msra.mxu0 0
    %63 = vmatprep.subr.bf16.mxu0 0
    %64 = vmatpush2.bf16.msra.mxu0 0
    %65 = vmatprep.subr.bf16.mxu0 0
    %66 = vmatpush2.bf16.msra.mxu0 0
    %67 = vmatprep.mubr.bf16.mxu0 0
    %68 = vmatmul.mubr.bf16.gmra.mxu0 %v33
    %v69 = vpop.f32.mrf.mxu0
    %v70 = vadd.f32 0.0, %v69
    %v71 = vpop.f32.mrf.mxu0
    %v72 = vpop.f32.mrf.mxu0
    %v73 = vpop.f32.mrf.mxu0
    %74 = vdwg.mxu0
    %vm75 = vcmask 123904
    %76 = vst.msk [vmem:[#allocation2] sm:$0x3] %vm75, %v70
    // Predicated region
    $region10: #{visual_encoder_forward.27} parent=1 // pred_check
      _
    $region11: #{visual_encoder_forward.27} parent=1 // pred_check_branch
      %78 = sbr.rel (0) target = $region13
    $region12: #{visual_encoder_forward.27} parent=1 // pred_region
      %s80 = ssub.s32 32, 32
      %81 = vsyncadd [#allocation3], %s80
      %s83 = sshll.u32 [#allocation2], 4
      %s84 = int_to_ptr.vmem [resolvable:$true] %s83
      %86 = dma.vmem_to_hbm [thread:$0]  %s84, 32, %s2, [#allocation3]
    $region13: #{visual_encoder_forward.27} parent=1 // pred_fallthru
      _
    // Predicated region
    $region14: #{visual_encoder_forward.27} parent=1 // pred_check
      _
    $region15: #{visual_encoder_forward.27} parent=1 // pred_check_branch
      %88 = sbr.rel (0) target = $region17
    $region16: #{visual_encoder_forward.27} parent=1 // pred_region
      %89 = dma.done [#allocation3], 32
    $region17: #{visual_encoder_forward.27} parent=1 // pred_fallthru
      _
    %90 = vsyncpa [#allocation3], 1

</llo_original>
